<compile_context>
chip_gen: v7x
topology: tpu7x:2x2x1
jax: 0.10.0
libtpu: 0.0.40
codegen_flags: <defaults>
</compile_context>

<pallas_src>
import functools

import jax
import jax.numpy as jnp
from jax import lax
from jax.experimental import pallas as pl
from jax.experimental.pallas import tpu as pltpu

BN_EPS = 1e-5


def _vae_kernel(x_ref, we_ref, pz_ref, wd1d_ref, p512_ref, wd2_hbm_ref,
                out_ref, kl_ref, wd2_vmem, wd2_sem, *, true_b: int, z_dim: int):
    # Kick off the 1 MiB wd2 HBM->VMEM copy immediately; it overlaps with all
    # of the front-end compute and is only waited on before the final matmul.
    wd2_cp = pltpu.make_async_copy(wd2_hbm_ref, wd2_vmem, wd2_sem)
    wd2_cp.start()

    x = x_ref[...]                                          # (Bp, 512) f32
    bp = x.shape[0]

    # Row mask: padded batch rows must not contribute to BN stats / KL mean.
    row = lax.broadcasted_iota(jnp.int32, (bp, 1), 0)
    rmask = (row < true_b).astype(jnp.float32)              # (Bp, 1)
    inv_b = 1.0 / float(true_b)

    # Packed small parameters (static sublane slices, cheap).
    be = pz_ref[0:1, :]                                     # (1, 2z)
    g1 = pz_ref[1:2, :]                                     # (1, 2z) (mu half used)
    b1 = pz_ref[2:3, :]                                     # (1, 2z) (mu half used)
    g2 = p512_ref[0:1, :]
    b2 = p512_ref[1:2, :]
    bd2 = p512_ref[2:3, :]

    # ---- encode: fused Linear(512, 2*z) — lanes [0,z) = mu, [z,2z) = logvar ----
    enc = jnp.dot(x, we_ref[...], preferred_element_type=jnp.float32) + be

    # Training-mode BatchNorm batch stats, computed per lane over real rows.
    # (Stats on the logvar lanes are computed but never used — same vregs.)
    m1 = jnp.sum(enc * rmask, axis=0, keepdims=True) * inv_b
    d1 = (enc - m1) * rmask
    v1 = jnp.sum(d1 * d1, axis=0, keepdims=True) * inv_b    # biased variance
    bn_val = (enc - m1) * lax.rsqrt(v1 + BN_EPS) * g1 + b1
    exp_val = jnp.exp(enc)                                  # lanes >= z: std

    lane = lax.broadcasted_iota(jnp.int32, enc.shape, 1)
    is_mu = lane < z_dim
    # [bn(mu) | std] — eps is drawn but unused in the PyTorch reference.
    zq2 = jnp.where(is_mu, bn_val, exp_val)                 # (Bp, 2z)

    # ---- decode: Linear(z,512) -> BatchNorm1d(512) -> ReLU -> Linear(512,512) ----
    # z_q @ wd1 == [bn(mu) | std] @ [wd1; wd1].  bd1 intentionally omitted: a
    # per-feature bias cancels exactly under the training-mode BN mean subtraction.
    h1 = jnp.dot(zq2, wd1d_ref[...], preferred_element_type=jnp.float32)
    m2 = jnp.sum(h1 * rmask, axis=0, keepdims=True) * inv_b
    d2 = (h1 - m2) * rmask
    v2 = jnp.sum(d2 * d2, axis=0, keepdims=True) * inv_b
    h1_act = jnp.maximum((h1 - m2) * lax.rsqrt(v2 + BN_EPS) * g2 + b2, 0.0)

    # ---- KL: mean(0.5*(mu^2 + exp(logvar)^2 - 1) - logvar) over true rows ----
    # mu lanes contribute 0.5*mu^2, logvar lanes contribute 0.5*(std^2 - 1) - logvar;
    # both halves live in the same (Bp, 2z) tile, routed by the same lane mask.
    kl_terms = jnp.where(is_mu,
                         0.5 * (enc * enc),
                         0.5 * (exp_val * exp_val - 1.0) - enc)
    kl_ref[0, 0] = jnp.sum(kl_terms * rmask) / float(true_b * z_dim)

    # Final matmul needs wd2 resident in VMEM.
    wd2_cp.wait()
    out_ref[...] = jnp.dot(h1_act, wd2_vmem[...],
                           preferred_element_type=jnp.float32) + bd2


def prepare_params(params):
    """One-time parameter packing (hoisted out of the per-call forward path)."""
    we, be, g1, b1, wd1, bd1, g2, b2, wd2, bd2 = params
    z_dim = we.shape[1] // 2

    # Pad BN(z) affine params to 2z lanes (logvar half unused) and pack the
    # small (1, N) vectors into two arrays -> fewer DMA descriptors.
    g1p = jnp.concatenate([g1, jnp.ones_like(g1)], axis=1)    # (1, 2z)
    b1p = jnp.concatenate([b1, jnp.zeros_like(b1)], axis=1)   # (1, 2z)
    pz = jnp.concatenate([be, g1p, b1p], axis=0)              # (3, 2z)
    p512 = jnp.concatenate([g2, b2, bd2], axis=0)             # (3, 512)

    # Stack wd1 twice: z_q @ wd1 == [bn(mu) | std] @ [wd1; wd1].
    wd1d = jnp.concatenate([wd1, wd1], axis=0)                # (2z, 512)
    # bd1 is dropped: it cancels exactly under the training-mode BatchNorm mean.

    return dict(we=we, pz=pz, wd1d=wd1d, p512=p512, wd2=wd2, z_dim=z_dim)


def vae_lt_forward(x_bch, prep):
    """x_bch: (B, C, H) with C*H == 512. Returns (out (B,C,H), KL scalar)."""
    b, c, h = x_bch.shape
    assert c * h == 512
    x = x_bch.reshape(b, c * h).astype(jnp.float32)
    z_dim = prep["z_dim"]

    # Pad batch to a sublane multiple of 8; padded rows are masked inside.
    bp = max(8, ((b + 7) // 8) * 8)
    if bp != b:
        x = jnp.pad(x, ((0, bp - b), (0, 0)))

    flops = 2 * bp * 512 * (2 * z_dim) * 2 + 2 * bp * 512 * 512
    bytes_accessed = 4 * (bp * 512 * 2 + 512 * 2 * z_dim + 2 * z_dim * 512
                          + 512 * 512 + 3 * (2 * z_dim) + 3 * 512)
    transcendentals = bp * 2 * z_dim + 2 * z_dim + 512

    kernel = functools.partial(_vae_kernel, true_b=b, z_dim=z_dim)
    out_flat, kl = pl.pallas_call(
        kernel,
        out_shape=(
            jax.ShapeDtypeStruct((bp, 512), jnp.float32),
            jax.ShapeDtypeStruct((1, 1), jnp.float32),
        ),
        in_specs=[
            pl.BlockSpec(memory_space=pltpu.MemorySpace.VMEM),   # x
            pl.BlockSpec(memory_space=pltpu.MemorySpace.VMEM),   # we
            pl.BlockSpec(memory_space=pltpu.MemorySpace.VMEM),   # pz
            pl.BlockSpec(memory_space=pltpu.MemorySpace.VMEM),   # wd1d
            pl.BlockSpec(memory_space=pltpu.MemorySpace.VMEM),   # p512
            pl.BlockSpec(memory_space=pl.ANY),                   # wd2 (manual DMA)
        ],
        out_specs=(
            pl.BlockSpec(memory_space=pltpu.MemorySpace.VMEM),
            pl.BlockSpec(memory_space=pltpu.MemorySpace.SMEM),
        ),
        scratch_shapes=[
            pltpu.VMEM((512, 512), jnp.float32),                 # wd2 landing buffer
            pltpu.SemaphoreType.DMA,                             # wd2 copy semaphore
        ],
        cost_estimate=pl.CostEstimate(flops=flops,
                                      transcendentals=transcendentals,
                                      bytes_accessed=bytes_accessed),
    )(x, prep["we"], prep["pz"], prep["wd1d"], prep["p512"], prep["wd2"])

    return out_flat[:b].reshape(b, c, h), kl[0, 0]


def init_params(key, z_dim):
    """Deterministic synthetic parameters matching the nn.Module shapes."""
    k = jax.random.split(key, 6)
    we  = (jax.random.normal(k[0], (512, 2 * z_dim)) * 0.05).astype(jnp.float32)
    be  = (jax.random.normal(k[1], (1, 2 * z_dim)) * 0.05).astype(jnp.float32)
    g1  = jnp.ones((1, z_dim), jnp.float32)          # BatchNorm1d(z_dim) weight
    b1  = jnp.zeros((1, z_dim), jnp.float32)         # BatchNorm1d(z_dim) bias
    wd1 = (jax.random.normal(k[2], (z_dim, 512)) * 0.05).astype(jnp.float32)
    bd1 = (jax.random.normal(k[3], (1, 512)) * 0.05).astype(jnp.float32)
    g2  = jnp.ones((1, 512), jnp.float32)            # BatchNorm1d(512) weight
    b2  = jnp.zeros((1, 512), jnp.float32)           # BatchNorm1d(512) bias
    wd2 = (jax.random.normal(k[4], (512, 512)) * 0.05).astype(jnp.float32)
    bd2 = (jax.random.normal(k[5], (1, 512)) * 0.05).astype(jnp.float32)
    return (we, be, g1, b1, wd1, bd1, g2, b2, wd2, bd2)


def _reference(x_bch, params):
    """Pure-JAX reference (bd1 included, as in the PyTorch module)."""
    b, c, h = x_bch.shape
    x = x_bch.reshape(b, -1).astype(jnp.float32)
    we, be, g1, b1, wd1, bd1, g2, b2, wd2, bd2 = params
    enc = x @ we + be
    z = enc.shape[1] // 2
    mu, logvar = enc[:, :z], enc[:, z:]
    m1 = mu.mean(0, keepdims=True); v1 = ((mu - m1) ** 2).mean(0, keepdims=True)
    mu_bn = (mu - m1) / jnp.sqrt(v1 + BN_EPS) * g1 + b1
    z_q = mu_bn + jnp.exp(logvar)
    h1 = z_q @ wd1 + bd1
    m2 = h1.mean(0, keepdims=True); v2 = ((h1 - m2) ** 2).mean(0, keepdims=True)
    h1 = jnp.maximum((h1 - m2) / jnp.sqrt(v2 + BN_EPS) * g2 + b2, 0.0)
    out = h1 @ wd2 + bd2
    kl = jnp.mean(0.5 * (mu ** 2 + jnp.exp(logvar) ** 2 - 1.0) - logvar)
    return out.reshape(b, c, h), kl


if __name__ == "__main__":
    z_dim = 32
    B, C, H = 2, 4, 128          # C*H = 512 as required by Linear(512, ...)

    key = jax.random.PRNGKey(0)
    kx, kp = jax.random.split(key)
    x = jax.random.normal(kx, (B, C, H), dtype=jnp.float32)
    params = init_params(kp, z_dim)

    prep = prepare_params(params)   # one-time packing, outside the forward path
    out, kl = jax.block_until_ready(vae_lt_forward(x, prep))

    out_ref, kl_ref = _reference(x, params)
    assert out.shape == (B, C, H)
    assert jnp.allclose(out, out_ref, atol=1e-4, rtol=1e-4)
    assert jnp.allclose(kl, kl_ref, atol=1e-4, rtol=1e-4)

    print("KERNEL_OK")
</pallas_src>

<mosaic_0001>
module attributes {stable_mosaic.version = 11 : i64} {
  func.func @_vae_kernel(%arg0: memref<8x512xf32, #tpu.memory_space<vmem>>, %arg1: memref<512x64xf32, #tpu.memory_space<vmem>>, %arg2: memref<3x64xf32, #tpu.memory_space<vmem>>, %arg3: memref<64x512xf32, #tpu.memory_space<vmem>>, %arg4: memref<3x512xf32, #tpu.memory_space<vmem>>, %arg5: memref<512x512xf32, #tpu.memory_space<any>>, %arg6: memref<8x512xf32, #tpu.memory_space<vmem>>, %arg7: memref<1x1xf32, #tpu.memory_space<smem>>, %arg8: memref<512x512xf32, #tpu.memory_space<vmem>>, %arg9: memref<!tpu.dma_semaphore, #tpu.memory_space<semaphore_mem>>) attributes {dimension_semantics = [], scalar_prefetch = 0 : i64, scratch_operands = 2 : i64, tpu.core_type = #tpu.core_type<tc>} {
    tpu.enqueue_dma source(%arg5 : memref<512x512xf32, #tpu.memory_space<any>>) target(%arg8 : memref<512x512xf32, #tpu.memory_space<vmem>>) target_semaphore(%arg9 : memref<!tpu.dma_semaphore, #tpu.memory_space<semaphore_mem>>)
    %c0 = arith.constant 0 : index
    %c0_0 = arith.constant 0 : index
    %0 = vector.load %arg0[%c0, %c0_0] : memref<8x512xf32, #tpu.memory_space<vmem>>, vector<8x512xf32>
    %1 = tpu.iota {dimensions = array<i32: 0>} : vector<8x1xi32>
    %c2_i32 = arith.constant 2 : i32
    %2 = vector.broadcast %c2_i32 : i32 to vector<8x1xi32>
    %3 = arith.cmpi slt, %1, %2 : vector<8x1xi32>
    %4 = arith.extui %3 : vector<8x1xi1> to vector<8x1xi32>
    %5 = arith.sitofp %4 : vector<8x1xi32> to vector<8x1xf32>
    %c0_1 = arith.constant 0 : index
    %c0_2 = arith.constant 0 : index
    %6 = vector.load %arg2[%c0_1, %c0_2] : memref<3x64xf32, #tpu.memory_space<vmem>>, vector<1x64xf32>
    %c1 = arith.constant 1 : index
    %c0_3 = arith.constant 0 : index
    %7 = vector.load %arg2[%c1, %c0_3] : memref<3x64xf32, #tpu.memory_space<vmem>>, vector<1x64xf32>
    %c2 = arith.constant 2 : index
    %c0_4 = arith.constant 0 : index
    %8 = vector.load %arg2[%c2, %c0_4] : memref<3x64xf32, #tpu.memory_space<vmem>>, vector<1x64xf32>
    %c0_5 = arith.constant 0 : index
    %c0_6 = arith.constant 0 : index
    %9 = vector.load %arg4[%c0_5, %c0_6] : memref<3x512xf32, #tpu.memory_space<vmem>>, vector<1x512xf32>
    %c1_7 = arith.constant 1 : index
    %c0_8 = arith.constant 0 : index
    %10 = vector.load %arg4[%c1_7, %c0_8] : memref<3x512xf32, #tpu.memory_space<vmem>>, vector<1x512xf32>
    %c2_9 = arith.constant 2 : index
    %c0_10 = arith.constant 0 : index
    %11 = vector.load %arg4[%c2_9, %c0_10] : memref<3x512xf32, #tpu.memory_space<vmem>>, vector<1x512xf32>
    %c0_11 = arith.constant 0 : index
    %c0_12 = arith.constant 0 : index
    %12 = vector.load %arg1[%c0_11, %c0_12] : memref<512x64xf32, #tpu.memory_space<vmem>>, vector<512x64xf32>
    %cst = arith.constant dense<0.000000e+00> : vector<8x64xf32>
    %13 = tpu.matmul %0, %12, %cst {dimension_numbers = #tpu.dot_dimension_numbers<[1], [0], [0], [1], [0, 0, 1, 1], [], []>} : vector<8x512xf32>, vector<512x64xf32>, vector<8x64xf32> -> vector<8x64xf32>
    %14 = vector.broadcast %6 : vector<1x64xf32> to vector<8x64xf32>
    %15 = arith.addf %13, %14 : vector<8x64xf32>
    %16 = vector.broadcast %5 : vector<8x1xf32> to vector<8x64xf32>
    %17 = arith.mulf %15, %16 : vector<8x64xf32>
    %cst_13 = arith.constant dense<0.000000e+00> : vector<64xf32>
    %18 = vector.multi_reduction <add>, %17, %cst_13 [0] : vector<8x64xf32> to vector<64xf32>
    %19 = vector.shape_cast %18 : vector<64xf32> to vector<1x64xf32>
    %cst_14 = arith.constant 5.000000e-01 : f32
    %20 = vector.broadcast %cst_14 : f32 to vector<1x64xf32>
    %21 = arith.mulf %19, %20 : vector<1x64xf32>
    %22 = vector.broadcast %21 : vector<1x64xf32> to vector<8x64xf32>
    %23 = arith.subf %15, %22 : vector<8x64xf32>
    %24 = vector.broadcast %5 : vector<8x1xf32> to vector<8x64xf32>
    %25 = arith.mulf %23, %24 : vector<8x64xf32>
    %26 = arith.mulf %25, %25 : vector<8x64xf32>
    %cst_15 = arith.constant dense<0.000000e+00> : vector<64xf32>
    %27 = vector.multi_reduction <add>, %26, %cst_15 [0] : vector<8x64xf32> to vector<64xf32>
    %28 = vector.shape_cast %27 : vector<64xf32> to vector<1x64xf32>
    %cst_16 = arith.constant 5.000000e-01 : f32
    %29 = vector.broadcast %cst_16 : f32 to vector<1x64xf32>
    %30 = arith.mulf %28, %29 : vector<1x64xf32>
    %31 = vector.broadcast %21 : vector<1x64xf32> to vector<8x64xf32>
    %32 = arith.subf %15, %31 : vector<8x64xf32>
    %cst_17 = arith.constant 9.99999974E-6 : f32
    %33 = vector.broadcast %cst_17 : f32 to vector<1x64xf32>
    %34 = arith.addf %30, %33 : vector<1x64xf32>
    %35 = math.rsqrt %34 : vector<1x64xf32>
    %36 = vector.broadcast %35 : vector<1x64xf32> to vector<8x64xf32>
    %37 = arith.mulf %32, %36 : vector<8x64xf32>
    %38 = vector.broadcast %7 : vector<1x64xf32> to vector<8x64xf32>
    %39 = arith.mulf %37, %38 : vector<8x64xf32>
    %40 = vector.broadcast %8 : vector<1x64xf32> to vector<8x64xf32>
    %41 = arith.addf %39, %40 : vector<8x64xf32>
    %42 = math.exp %15 : vector<8x64xf32>
    %43 = tpu.iota {dimensions = array<i32: 1>} : vector<8x64xi32>
    %c32_i32 = arith.constant 32 : i32
    %44 = vector.broadcast %c32_i32 : i32 to vector<8x64xi32>
    %45 = arith.cmpi slt, %43, %44 : vector<8x64xi32>
    %46 = arith.select %45, %41, %42 : vector<8x64xi1>, vector<8x64xf32>
    %c0_18 = arith.constant 0 : index
    %c0_19 = arith.constant 0 : index
    %47 = vector.load %arg3[%c0_18, %c0_19] : memref<64x512xf32, #tpu.memory_space<vmem>>, vector<64x512xf32>
    %cst_20 = arith.constant dense<0.000000e+00> : vector<8x512xf32>
    %48 = tpu.matmul %46, %47, %cst_20 {dimension_numbers = #tpu.dot_dimension_numbers<[1], [0], [0], [1], [0, 0, 1, 1], [], []>} : vector<8x64xf32>, vector<64x512xf32>, vector<8x512xf32> -> vector<8x512xf32>
    %49 = vector.broadcast %5 : vector<8x1xf32> to vector<8x512xf32>
    %50 = arith.mulf %48, %49 : vector<8x512xf32>
    %cst_21 = arith.constant dense<0.000000e+00> : vector<512xf32>
    %51 = vector.multi_reduction <add>, %50, %cst_21 [0] : vector<8x512xf32> to vector<512xf32>
    %52 = vector.shape_cast %51 : vector<512xf32> to vector<1x512xf32>
    %cst_22 = arith.constant 5.000000e-01 : f32
    %53 = vector.broadcast %cst_22 : f32 to vector<1x512xf32>
    %54 = arith.mulf %52, %53 : vector<1x512xf32>
    %55 = vector.broadcast %54 : vector<1x512xf32> to vector<8x512xf32>
    %56 = arith.subf %48, %55 : vector<8x512xf32>
    %57 = vector.broadcast %5 : vector<8x1xf32> to vector<8x512xf32>
    %58 = arith.mulf %56, %57 : vector<8x512xf32>
    %59 = arith.mulf %58, %58 : vector<8x512xf32>
    %cst_23 = arith.constant dense<0.000000e+00> : vector<512xf32>
    %60 = vector.multi_reduction <add>, %59, %cst_23 [0] : vector<8x512xf32> to vector<512xf32>
    %61 = vector.shape_cast %60 : vector<512xf32> to vector<1x512xf32>
    %cst_24 = arith.constant 5.000000e-01 : f32
    %62 = vector.broadcast %cst_24 : f32 to vector<1x512xf32>
    %63 = arith.mulf %61, %62 : vector<1x512xf32>
    %64 = vector.broadcast %54 : vector<1x512xf32> to vector<8x512xf32>
    %65 = arith.subf %48, %64 : vector<8x512xf32>
    %cst_25 = arith.constant 9.99999974E-6 : f32
    %66 = vector.broadcast %cst_25 : f32 to vector<1x512xf32>
    %67 = arith.addf %63, %66 : vector<1x512xf32>
    %68 = math.rsqrt %67 : vector<1x512xf32>
    %69 = vector.broadcast %68 : vector<1x512xf32> to vector<8x512xf32>
    %70 = arith.mulf %65, %69 : vector<8x512xf32>
    %71 = vector.broadcast %9 : vector<1x512xf32> to vector<8x512xf32>
    %72 = arith.mulf %70, %71 : vector<8x512xf32>
    %73 = vector.broadcast %10 : vector<1x512xf32> to vector<8x512xf32>
    %74 = arith.addf %72, %73 : vector<8x512xf32>
    %cst_26 = arith.constant 0.000000e+00 : f32
    %75 = vector.broadcast %cst_26 : f32 to vector<8x512xf32>
    %76 = arith.maximumf %74, %75 : vector<8x512xf32>
    %77 = arith.mulf %15, %15 : vector<8x64xf32>
    %cst_27 = arith.constant 5.000000e-01 : f32
    %78 = vector.broadcast %cst_27 : f32 to vector<8x64xf32>
    %79 = arith.mulf %78, %77 : vector<8x64xf32>
    %80 = arith.mulf %42, %42 : vector<8x64xf32>
    %cst_28 = arith.constant 1.000000e+00 : f32
    %81 = vector.broadcast %cst_28 : f32 to vector<8x64xf32>
    %82 = arith.subf %80, %81 : vector<8x64xf32>
    %cst_29 = arith.constant 5.000000e-01 : f32
    %83 = vector.broadcast %cst_29 : f32 to vector<8x64xf32>
    %84 = arith.mulf %83, %82 : vector<8x64xf32>
    %85 = arith.subf %84, %15 : vector<8x64xf32>
    %86 = arith.select %45, %79, %85 : vector<8x64xi1>, vector<8x64xf32>
    %87 = vector.broadcast %5 : vector<8x1xf32> to vector<8x64xf32>
    %88 = arith.mulf %86, %87 : vector<8x64xf32>
    %89 = vector.shape_cast %88 : vector<8x64xf32> to vector<1x8x64xf32>
    %cst_30 = arith.constant dense<0.000000e+00> : vector<1xf32>
    %90 = vector.multi_reduction <add>, %89, %cst_30 [1, 2] : vector<1x8x64xf32> to vector<1xf32>
    %91 = vector.shape_cast %90 : vector<1xf32> to vector<1x1x1xf32>
    %92 = vector.extract %91[0, 0, 0] : f32 from vector<1x1x1xf32>
    %cst_31 = arith.constant 6.400000e+01 : f32
    %93 = arith.divf %92, %cst_31 : f32
    %c0_32 = arith.constant 0 : index
    %c0_33 = arith.constant 0 : index
    %94 = memref.load %arg7[%c0_32, %c0_33] : memref<1x1xf32, #tpu.memory_space<smem>>
    memref.store %93, %arg7[%c0_32, %c0_33] : memref<1x1xf32, #tpu.memory_space<smem>>
    tpu.wait_dma2 semaphore(%arg9 : memref<!tpu.dma_semaphore, #tpu.memory_space<semaphore_mem>>) src(%arg5 : memref<512x512xf32, #tpu.memory_space<any>>) dst(%arg8 : memref<512x512xf32, #tpu.memory_space<vmem>>)
    %c0_34 = arith.constant 0 : index
    %c0_35 = arith.constant 0 : index
    %95 = vector.load %arg8[%c0_34, %c0_35] : memref<512x512xf32, #tpu.memory_space<vmem>>, vector<512x512xf32>
    %cst_36 = arith.constant dense<0.000000e+00> : vector<8x512xf32>
    %96 = tpu.matmul %76, %95, %cst_36 {dimension_numbers = #tpu.dot_dimension_numbers<[1], [0], [0], [1], [0, 0, 1, 1], [], []>} : vector<8x512xf32>, vector<512x512xf32>, vector<8x512xf32> -> vector<8x512xf32>
    %97 = vector.broadcast %11 : vector<1x512xf32> to vector<8x512xf32>
    %98 = arith.addf %96, %97 : vector<8x512xf32>
    %c0_37 = arith.constant 0 : index
    %c0_38 = arith.constant 0 : index
    %99 = vector.load %arg6[%c0_37, %c0_38] : memref<8x512xf32, #tpu.memory_space<vmem>>, vector<8x512xf32>
    tpu.vector_store %arg6[%c0_37, %c0_38], %98 {strides = array<i32>} : memref<8x512xf32, #tpu.memory_space<vmem>>, vector<8x512xf32>,
    return
  }
}

</mosaic_0001>

<llo_original>
// kernel: tpu_custom_call.1
$region0: #{tpu_custom_call.1}
  #allocation0 [shape = 'u32[]', space=smem, size = 0x4, offset = 0x4, fixed_abs, tag = 'smem constant byte address 0x4 - core index']
  #allocation1 [shape = 'u32[144,128]{1,0:T(1,128)}', space=vmem, size = 0x12000, scoped, tag = 'internal scratch']
  #allocation2 [shape = 'f32[512,512]{1,0:T(8,128)}', space=vmem, size = 0x100000, scoped, tag = 'scratch operand']
  #allocation3 [shape = 's32[1]{0}', space=sflag, size = 0x4, scoped, tag = 'scratch operand']
  #allocation8 [shape = 's32[]', space=sflag, size = 0x4, offset = 0, fixed_abs, tag = 'sflag constant byte address 0x0 - dummy sync flag']
  #allocation9 [shape = 's32[]', space=sflag, size = 0x4, offset = 0, fixed_abs, tag = 'sflag constant byte address 0x0 - dummy sync flag']
  #allocation10 [shape = 'u32[]', space=smem, size = 0x4, offset = 0x44, fixed_abs, tag = 'smem constant byte address 0x44 - assertion arg 0']
  #allocation11 [shape = 'u32[]', space=smem, size = 0x4, offset = 0x48, fixed_abs, tag = 'smem constant byte address 0x48 - assertion arg 1']
  %s0 = inlined_call_operand.vmem [shape: f32[8,512], index: 0, kind: input, shape index: {}]
  %s1 = inlined_call_operand.vmem [shape: f32[512,64], index: 1, kind: input, shape index: {}]
  %s2 = inlined_call_operand.vmem [shape: f32[3,64], index: 2, kind: input, shape index: {}]
  %s3 = inlined_call_operand.vmem [shape: f32[64,512], index: 3, kind: input, shape index: {}]
  %s4 = inlined_call_operand.vmem [shape: f32[3,512], index: 4, kind: input, shape index: {}]
  %s5 = inlined_call_operand.hbm [shape: f32[512,512], index: 5, kind: input, shape index: {}]
  %s6 = inlined_call_operand.hbm [shape: f32[8,512], index: 6, kind: output, shape index: {0}]
  %s7 = inlined_call_operand.hbm [shape: f32[1,1], index: 7, kind: output, shape index: {1}]
  %8 = xla_tuple %s6, %s7
  %s9 = sld [smem:[#allocation0]]
  $region42: #{tpu_custom_call.1} parent=0
    _
  %s11 = ssub.s32 1, %s9
  %s12 = scalar_select 0, %s11, %s9
  $region1: #{tpu_custom_call.1} parent=0
    #allocation4 [shape = 'u8[16384]{0}', space=vmem, size = 0x4000, scoped, tag = 'output window, operand 0, single buffered']
    #allocation5 [shape = 's32[1]{0}', space=sflag, size = 0x4, scoped, tag = 'scoped memory for tpu_custom_call.1']
    #allocation6 [shape = 's32[1]{0}', space=sflag, size = 0x4, scoped, tag = 'scoped memory for tpu_custom_call.1']
    #allocation7 [shape = 'u8[512]{0}', space=smem, size = 0x200, scoped, tag = 'output window, operand 1, single buffered']
    %13 = vsyncpa [#allocation5], 0
    %14 = vsyncpa [#allocation6], 0
    // Predicated region
    $region2: #{tpu_custom_call.1} parent=1 // pred_check
      _
    $region3: #{tpu_custom_call.1} parent=1 // pred_check_branch
      %16 = sbr.rel (0) target = $region5
    $region4: #{tpu_custom_call.1} parent=1 // pred_region
      _
    $region5: #{tpu_custom_call.1} parent=1 // pred_fallthru
      _
    // Predicated region
    $region6: #{tpu_custom_call.1} parent=1 // pred_check
      _
    $region7: #{tpu_custom_call.1} parent=1 // pred_check_branch
      %18 = sbr.rel (0) target = $region9
    $region8: #{tpu_custom_call.1} parent=1 // pred_region
      _
    $region9: #{tpu_custom_call.1} parent=1 // pred_fallthru
      _
    // Predicated region
    $region10: #{tpu_custom_call.1} parent=1 // pred_check
      _
    $region11: #{tpu_custom_call.1} parent=1 // pred_check_branch
      %20 = sbr.rel (0) target = $region13
    $region12: #{tpu_custom_call.1} parent=1 // pred_region
      _
    $region13: #{tpu_custom_call.1} parent=1 // pred_fallthru
      _
    // Predicated region
    $region14: #{tpu_custom_call.1} parent=1 // pred_check
      _
    $region15: #{tpu_custom_call.1} parent=1 // pred_check_branch
      %22 = sbr.rel (0) target = $region17
    $region16: #{tpu_custom_call.1} parent=1 // pred_region
      _
    $region17: #{tpu_custom_call.1} parent=1 // pred_fallthru
      _
    // Predicated region
    $region18: #{tpu_custom_call.1} parent=1 // pred_check
      _
    $region19: #{tpu_custom_call.1} parent=1 // pred_check_branch
      %24 = sbr.rel (0) target = $region21
    $region20: #{tpu_custom_call.1} parent=1 // pred_region
      _
    $region21: #{tpu_custom_call.1} parent=1 // pred_fallthru
      _
    // Predicated region
    $region22: #{tpu_custom_call.1} parent=1 // pred_check
      _
    $region23: #{tpu_custom_call.1} parent=1 // pred_check_branch
      %26 = sbr.rel target = $region25
    $region24: #{tpu_custom_call.1} parent=1 // pred_region
      %27 = sst [smem:[#allocation10]] [#allocation9]
      %28 = sst [smem:[#allocation11]] [#allocation8]
    $region25: #{tpu_custom_call.1} parent=1 // pred_fallthru
      _
    %30 = shalt.err (0)
    %s32 = sshll.u32 [#allocation2], 4
    %s33 = int_to_ptr.vmem [resolvable:$true] %s32
    %35 = dma.hbm_to_vmem [thread:$0]  %s5, 32768, %s33, [#allocation3]
    %v36 = vld [vmem:[%s0] sm:$0xff]
    %v37 = vld [vmem:[%s0 + $0x8] sm:$0xff]
    %v38 = vld [vmem:[%s0 + $0x10] sm:$0xff]
    %v39 = vld [vmem:[%s0 + $0x18] sm:$0xff]
    %v40 = vlaneseq
    %v41 = vshrl.u32 %v40, 7
    %vm42 = vcmp.lt.s32.totalorder %v41, 2
    %v43 = vsel %vm42, 1, 0
    %v44 = vcvt.s32.f32 %v43
    %v45 = vld [vmem:[%s2] sm:$0x1]
    %v46 = vld [vmem:[%s2 + $0x1] sm:$0x1]
    %v47 = vld [vmem:[%s2 + $0x2] sm:$0x1]
    %v48 = vld [vmem:[%s4] ss:$4 sm:$0xf]
    %s49 = scalar_lea.vmem %s4, 1
    %v50 = vld [vmem:[%s49] ss:$4 sm:$0xf]
    %s51 = scalar_lea.vmem %s4, 2
    %v52 = vld [vmem:[%s51] ss:$4 sm:$0xf]
    %v53 = vld [vmem:[%s1] sm:$0xff]
    %v54 = vld [vmem:[%s1 + $0x8] sm:$0xff]
    %v55 = vld [vmem:[%s1 + $0x10] sm:$0xff]
    %v56 = vld [vmem:[%s1 + $0x18] sm:$0xff]
    %v57 = vld [vmem:[%s1 + $0x20] sm:$0xff]
    %v58 = vld [vmem:[%s1 + $0x28] sm:$0xff]
    %v59 = vld [vmem:[%s1 + $0x30] sm:$0xff]
    %v60 = vld [vmem:[%s1 + $0x38] sm:$0xff]
    %v61 = vld [vmem:[%s1 + $0x40] sm:$0xff]
    %v62 = vld [vmem:[%s1 + $0x48] sm:$0xff]
    %v63 = vld [vmem:[%s1 + $0x50] sm:$0xff]
    %v64 = vld [vmem:[%s1 + $0x58] sm:$0xff]
    %v65 = vld [vmem:[%s1 + $0x60] sm:$0xff]
    %v66 = vld [vmem:[%s1 + $0x68] sm:$0xff]
    %v67 = vld [vmem:[%s1 + $0x70] sm:$0xff]
    %v68 = vld [vmem:[%s1 + $0x78] sm:$0xff]
    %v69 = vld [vmem:[%s1 + $0x80] sm:$0xff]
    %v70 = vld [vmem:[%s1 + $0x88] sm:$0xff]
    %v71 = vld [vmem:[%s1 + $0x90] sm:$0xff]
    %v72 = vld [vmem:[%s1 + $0x98] sm:$0xff]
    %v73 = vld [vmem:[%s1 + $0xa0] sm:$0xff]
    %v74 = vld [vmem:[%s1 + $0xa8] sm:$0xff]
    %v75 = vld [vmem:[%s1 + $0xb0] sm:$0xff]
    %v76 = vld [vmem:[%s1 + $0xb8] sm:$0xff]
    %v77 = vld [vmem:[%s1 + $0xc0] sm:$0xff]
    %v78 = vld [vmem:[%s1 + $0xc8] sm:$0xff]
    %v79 = vld [vmem:[%s1 + $0xd0] sm:$0xff]
    %v80 = vld [vmem:[%s1 + $0xd8] sm:$0xff]
    %v81 = vld [vmem:[%s1 + $0xe0] sm:$0xff]
    %v82 = vld [vmem:[%s1 + $0xe8] sm:$0xff]
    %v83 = vld [vmem:[%s1 + $0xf0] sm:$0xff]
    %v84 = vld [vmem:[%s1 + $0xf8] sm:$0xff]
    %v85 = vld [vmem:[%s1 + $0x100] sm:$0xff]
    %v86 = vld [vmem:[%s1 + $0x108] sm:$0xff]
    %v87 = vld [vmem:[%s1 + $0x110] sm:$0xff]
    %v88 = vld [vmem:[%s1 + $0x118] sm:$0xff]
    %v89 = vld [vmem:[%s1 + $0x120] sm:$0xff]
    %v90 = vld [vmem:[%s1 + $0x128] sm:$0xff]
    %v91 = vld [vmem:[%s1 + $0x130] sm:$0xff]
    %v92 = vld [vmem:[%s1 + $0x138] sm:$0xff]
    %v93 = vld [vmem:[%s1 + $0x140] sm:$0xff]
    %v94 = vld [vmem:[%s1 + $0x148] sm:$0xff]
    %v95 = vld [vmem:[%s1 + $0x150] sm:$0xff]
    %v96 = vld [vmem:[%s1 + $0x158] sm:$0xff]
    %v97 = vld [vmem:[%s1 + $0x160] sm:$0xff]
    %v98 = vld [vmem:[%s1 + $0x168] sm:$0xff]
    %v99 = vld [vmem:[%s1 + $0x170] sm:$0xff]
    %v100 = vld [vmem:[%s1 + $0x178] sm:$0xff]
    %v101 = vld [vmem:[%s1 + $0x180] sm:$0xff]
    %v102 = vld [vmem:[%s1 + $0x188] sm:$0xff]
    %v103 = vld [vmem:[%s1 + $0x190] sm:$0xff]
    %v104 = vld [vmem:[%s1 + $0x198] sm:$0xff]
    %v105 = vld [vmem:[%s1 + $0x1a0] sm:$0xff]
    %v106 = vld [vmem:[%s1 + $0x1a8] sm:$0xff]
    %v107 = vld [vmem:[%s1 + $0x1b0] sm:$0xff]
    %v108 = vld [vmem:[%s1 + $0x1b8] sm:$0xff]
    %v109 = vld [vmem:[%s1 + $0x1c0] sm:$0xff]
    %v110 = vld [vmem:[%s1 + $0x1c8] sm:$0xff]
    %v111 = vld [vmem:[%s1 + $0x1d0] sm:$0xff]
    %v112 = vld [vmem:[%s1 + $0x1d8] sm:$0xff]
    %v113 = vld [vmem:[%s1 + $0x1e0] sm:$0xff]
    %v114 = vld [vmem:[%s1 + $0x1e8] sm:$0xff]
    %v115 = vld [vmem:[%s1 + $0x1f0] sm:$0xff]
    %v116 = vld [vmem:[%s1 + $0x1f8] sm:$0xff]
    %v117 = vlaneseq
    %v118 = vshrl.u32 %v117, 7
    %v119 = vsub.s32 0, %v118
    %v120 = vrot.slane %v45, %v119
    %121 = vmatprep.subr.mxu0 0.0
    %122 = vmatpush1.msra.mxu0 %v53
    %123 = vmatprep.subr.mxu0 0.0
    %124 = vmatpush1.msra.mxu0 %v54
    %125 = vmatprep.subr.mxu0 0.0
    %126 = vmatpush1.msra.mxu0 %v55
    %127 = vmatprep.subr.mxu0 0.0
    %128 = vmatpush1.msra.mxu0 %v56
    %129 = vmatprep.subr.mxu0 0.0
    %130 = vmatpush1.msra.mxu0 %v57
    %131 = vmatprep.subr.mxu0 0.0
    %132 = vmatpush1.msra.mxu0 %v58
    %133 = vmatprep.subr.mxu0 0.0
    %134 = vmatpush1.msra.mxu0 %v59
    %135 = vmatprep.subr.mxu0 0.0
    %136 = vmatpush1.msra.mxu0 %v60
    %137 = vmatprep.subr.mxu0 0.0
    %138 = vmatpush1.msra.mxu0 %v61
    %139 = vmatprep.subr.mxu0 0.0
    %140 = vmatpush1.msra.mxu0 %v62
    %141 = vmatprep.subr.mxu0 0.0
    %142 = vmatpush1.msra.mxu0 %v63
    %143 = vmatprep.subr.mxu0 0.0
    %144 = vmatpush1.msra.mxu0 %v64
    %145 = vmatprep.subr.mxu0 0.0
    %146 = vmatpush1.msra.mxu0 %v65
    %147 = vmatprep.subr.mxu0 0.0
    %148 = vmatpush1.msra.mxu0 %v66
    %149 = vmatprep.subr.mxu0 0.0
    %150 = vmatpush1.msra.mxu0 %v67
    %151 = vmatprep.subr.mxu0 0.0
    %152 = vmatpush1.msra.mxu0 %v68
    %153 = vmatprep.subr.mxu0 0.0
    %154 = vmatpush1.msra.mxu0 %v69
    %155 = vmatprep.subr.mxu0 0.0
    %156 = vmatpush1.msra.mxu0 %v70
    %157 = vmatprep.subr.mxu0 0.0
    %158 = vmatpush1.msra.mxu0 %v71
    %159 = vmatprep.subr.mxu0 0.0
    %160 = vmatpush1.msra.mxu0 %v72
    %161 = vmatprep.subr.mxu0 0.0
    %162 = vmatpush1.msra.mxu0 %v73
    %163 = vmatprep.subr.mxu0 0.0
    %164 = vmatpush1.msra.mxu0 %v74
    %165 = vmatprep.subr.mxu0 0.0
    %166 = vmatpush1.msra.mxu0 %v75
    %167 = vmatprep.subr.mxu0 0.0
    %168 = vmatpush1.msra.mxu0 %v76
    %169 = vmatprep.subr.mxu0 0.0
    %170 = vmatpush1.msra.mxu0 %v77
    %171 = vmatprep.subr.mxu0 0.0
    %172 = vmatpush1.msra.mxu0 %v78
    %173 = vmatprep.subr.mxu0 0.0
    %174 = vmatpush1.msra.mxu0 %v79
    %175 = vmatprep.subr.mxu0 0.0
    %176 = vmatpush1.msra.mxu0 %v80
    %177 = vmatprep.subr.mxu0 0.0
    %178 = vmatpush1.msra.mxu0 %v81
    %179 = vmatprep.subr.mxu0 0.0
    %180 = vmatpush1.msra.mxu0 %v82
    %181 = vmatprep.subr.mxu0 0.0
    %182 = vmatpush1.msra.mxu0 %v83
    %183 = vmatprep.subr.mxu0 0.0
    %184 = vmatpush1.msra.mxu0 %v84
    %185 = vmatprep.mubr.f32.mxu0 %v37
    %186 = vmatmul.mubr.f32.gmra.mrb[0].mxu0 %v36
    %v187 = vpop.f32.mrb[0].mxu0
    %v188 = vadd.f32 %v120, %v187
    %v189 = vpop.f32.mrb[0].mxu0
    %190 = vdwg.mxu0
    %191 = vmatprep.subr.mxu0 0.0
    %192 = vmatpush1.msra.mxu0 %v85
    %193 = vmatprep.subr.mxu0 0.0
    %194 = vmatpush1.msra.mxu0 %v86
    %195 = vmatprep.subr.mxu0 0.0
    %196 = vmatpush1.msra.mxu0 %v87
    %197 = vmatprep.subr.mxu0 0.0
    %198 = vmatpush1.msra.mxu0 %v88
    %199 = vmatprep.subr.mxu0 0.0
    %200 = vmatpush1.msra.mxu0 %v89
    %201 = vmatprep.subr.mxu0 0.0
    %202 = vmatpush1.msra.mxu0 %v90
    %203 = vmatprep.subr.mxu0 0.0
    %204 = vmatpush1.msra.mxu0 %v91
    %205 = vmatprep.subr.mxu0 0.0
    %206 = vmatpush1.msra.mxu0 %v92
    %207 = vmatprep.subr.mxu0 0.0
    %208 = vmatpush1.msra.mxu0 %v93
    %209 = vmatprep.subr.mxu0 0.0
    %210 = vmatpush1.msra.mxu0 %v94
    %211 = vmatprep.subr.mxu0 0.0
    %212 = vmatpush1.msra.mxu0 %v95
    %213 = vmatprep.subr.mxu0 0.0
    %214 = vmatpush1.msra.mxu0 %v96
    %215 = vmatprep.subr.mxu0 0.0
    %216 = vmatpush1.msra.mxu0 %v97
    %217 = vmatprep.subr.mxu0 0.0
    %218 = vmatpush1.msra.mxu0 %v98
    %219 = vmatprep.subr.mxu0 0.0
    %220 = vmatpush1.msra.mxu0 %v99
    %221 = vmatprep.subr.mxu0 0.0
    %222 = vmatpush1.msra.mxu0 %v100
    %223 = vmatprep.subr.mxu0 0.0
    %224 = vmatpush1.msra.mxu0 %v101
    %225 = vmatprep.subr.mxu0 0.0
    %226 = vmatpush1.msra.mxu0 %v102
    %227 = vmatprep.subr.mxu0 0.0
    %228 = vmatpush1.msra.mxu0 %v103
    %229 = vmatprep.subr.mxu0 0.0
    %230 = vmatpush1.msra.mxu0 %v104
    %231 = vmatprep.subr.mxu0 0.0
    %232 = vmatpush1.msra.mxu0 %v105
    %233 = vmatprep.subr.mxu0 0.0
    %234 = vmatpush1.msra.mxu0 %v106
    %235 = vmatprep.subr.mxu0 0.0
    %236 = vmatpush1.msra.mxu0 %v107
    %237 = vmatprep.subr.mxu0 0.0
    %238 = vmatpush1.msra.mxu0 %v108
    %239 = vmatprep.subr.mxu0 0.0
    %240 = vmatpush1.msra.mxu0 %v109
    %241 = vmatprep.subr.mxu0 0.0
    %242 = vmatpush1.msra.mxu0 %v110
    %243 = vmatprep.subr.mxu0 0.0
    %244 = vmatpush1.msra.mxu0 %v111
    %245 = vmatprep.subr.mxu0 0.0
    %246 = vmatpush1.msra.mxu0 %v112
    %247 = vmatprep.subr.mxu0 0.0
    %248 = vmatpush1.msra.mxu0 %v113
    %249 = vmatprep.subr.mxu0 0.0
    %250 = vmatpush1.msra.mxu0 %v114
    %251 = vmatprep.subr.mxu0 0.0
    %252 = vmatpush1.msra.mxu0 %v115
    %253 = vmatprep.subr.mxu0 0.0
    %254 = vmatpush1.msra.mxu0 %v116
    %255 = vmatprep.mubr.f32.mxu0 %v39
    %256 = vmatmul.mubr.f32.gmra.mrb[0].mxu0 %v38
    %v257 = vpop.f32.mrb[0].mxu0
    %v258 = vadd.f32 %v188, %v257
    %v259 = vpop.f32.mrb[0].mxu0
    %260 = vdwg.mxu0
    %v261 = vmul.f32 %v258, %v44
    %vm262 = vcmask 523264
    %v263 = vsel %vm262, %v261, 0.0
    %v264 = vrot.slane %v263, 4
    %v265 = vadd.f32 %v263, %v264
    %v266 = vrot.slane %v265, 2
    %v267 = vadd.f32 %v265, %v266
    %v268 = vrot.slane %v267, 1
    %v269 = vadd.f32 %v267, %v268
    %v270 = vmul.f32 %v269, 0.5
    %v271 = vsub.f32 %v258, %v270
    %v272 = vmul.f32 %v271, %v44
    %v273 = vmul.f32 %v272, %v272
    %v274 = vsel %vm262, %v273, 0.0
    %v275 = vrot.slane %v274, 4
    %v276 = vadd.f32 %v274, %v275
    %v277 = vrot.slane %v276, 2
    %v278 = vadd.f32 %v276, %v277
    %v279 = vrot.slane %v278, 1
    %v280 = vadd.f32 %v278, %v279
    %v281 = vmul.f32 %v280, 0.5
    %v282 = vadd.f32 %v281, 1e-05
    %v283 = vrsqrt.pop %v282
    %v284 = vmul.f32 %v271, %v283
    %v285 = vlaneseq
    %v286 = vshrl.u32 %v285, 7
    %v287 = vsub.s32 0, %v286
    %v288 = vrot.slane %v46, %v287
    %v289 = vmul.f32 %v284, %v288
    %v290 = vlaneseq
    %v291 = vshrl.u32 %v290, 7
    %v292 = vsub.s32 0, %v291
    %v293 = vrot.slane %v47, %v292
    %v294 = vadd.f32 %v289, %v293
    %v295 = vmul.f32 %v258, 1.442695
    %v296 = vpow.pop %v295
    %v297 = vlaneseq
    %v298 = vand.u32 %v297, 127
    %vm299 = vcmp.lt.s32.totalorder %v298, 32
    %v300 = vsel %vm299, %v294, %v296
    %v301 = vld [vmem:[%s3] sm:$0xff]
    %v302 = vld [vmem:[%s3 + $0x8] sm:$0xff]
    %v303 = vld [vmem:[%s3 + $0x10] sm:$0xff]
    %v304 = vld [vmem:[%s3 + $0x18] sm:$0xff]
    %v305 = vld [vmem:[%s3 + $0x20] sm:$0xff]
    %v306 = vld [vmem:[%s3 + $0x28] sm:$0xff]
    %v307 = vld [vmem:[%s3 + $0x30] sm:$0xff]
    %v308 = vld [vmem:[%s3 + $0x38] sm:$0xff]
    %v309 = vld [vmem:[%s3 + $0x40] sm:$0xff]
    %v310 = vld [vmem:[%s3 + $0x48] sm:$0xff]
    %v311 = vld [vmem:[%s3 + $0x50] sm:$0xff]
    %v312 = vld [vmem:[%s3 + $0x58] sm:$0xff]
    %v313 = vld [vmem:[%s3 + $0x60] sm:$0xff]
    %v314 = vld [vmem:[%s3 + $0x68] sm:$0xff]
    %v315 = vld [vmem:[%s3 + $0x70] sm:$0xff]
    %v316 = vld [vmem:[%s3 + $0x78] sm:$0xff]
    %v317 = vld [vmem:[%s3 + $0x80] sm:$0xff]
    %v318 = vld [vmem:[%s3 + $0x88] sm:$0xff]
    %v319 = vld [vmem:[%s3 + $0x90] sm:$0xff]
    %v320 = vld [vmem:[%s3 + $0x98] sm:$0xff]
    %v321 = vld [vmem:[%s3 + $0xa0] sm:$0xff]
    %v322 = vld [vmem:[%s3 + $0xa8] sm:$0xff]
    %v323 = vld [vmem:[%s3 + $0xb0] sm:$0xff]
    %v324 = vld [vmem:[%s3 + $0xb8] sm:$0xff]
    %v325 = vld [vmem:[%s3 + $0xc0] sm:$0xff]
    %v326 = vld [vmem:[%s3 + $0xc8] sm:$0xff]
    %v327 = vld [vmem:[%s3 + $0xd0] sm:$0xff]
    %v328 = vld [vmem:[%s3 + $0xd8] sm:$0xff]
    %v329 = vld [vmem:[%s3 + $0xe0] sm:$0xff]
    %v330 = vld [vmem:[%s3 + $0xe8] sm:$0xff]
    %v331 = vld [vmem:[%s3 + $0xf0] sm:$0xff]
    %v332 = vld [vmem:[%s3 + $0xf8] sm:$0xff]
    %v334 = vsel %vm262, %v300, 0
    %336 = vmatprep.subr.mxu0 %v302
    %337 = vmatpush1.msra.mxu0 %v301
    %338 = vmatprep.subr.mxu0 %v306
    %339 = vmatpush1.msra.mxu0 %v305
    %340 = vmatprep.subr.mxu0 %v310
    %341 = vmatpush1.msra.mxu0 %v309
    %342 = vmatprep.subr.mxu0 %v314
    %343 = vmatpush1.msra.mxu0 %v313
    %344 = vmatprep.subr.mxu0 %v318
    %345 = vmatpush1.msra.mxu0 %v317
    %346 = vmatprep.subr.mxu0 %v322
    %347 = vmatpush1.msra.mxu0 %v321
    %348 = vmatprep.subr.mxu0 %v326
    %349 = vmatpush1.msra.mxu0 %v325
    %350 = vmatprep.subr.mxu0 %v330
    %351 = vmatpush1.msra.mxu0 %v329
    %352 = vmatprep.subr.mxu0 0.0
    %353 = vmatpush1.msra.mxu0 0.0
    %354 = vmatprep.subr.mxu0 0.0
    %355 = vmatpush1.msra.mxu0 0.0
    %356 = vmatprep.subr.mxu0 0.0
    %357 = vmatpush1.msra.mxu0 0.0
    %358 = vmatprep.subr.mxu0 0.0
    %359 = vmatpush1.msra.mxu0 0.0
    %360 = vmatprep.subr.mxu0 0.0
    %361 = vmatpush1.msra.mxu0 0.0
    %362 = vmatprep.subr.mxu0 0.0
    %363 = vmatpush1.msra.mxu0 0.0
    %364 = vmatprep.subr.mxu0 0.0
    %365 = vmatpush1.msra.mxu0 0.0
    %366 = vmatprep.subr.mxu0 0.0
    %367 = vmatpush1.msra.mxu0 0.0
    %368 = vmatprep.subr.mxu0 0.0
    %369 = vmatpush1.msra.mxu0 0.0
    %370 = vmatprep.subr.mxu0 0.0
    %371 = vmatpush1.msra.mxu0 0.0
    %372 = vmatprep.subr.mxu0 0.0
    %373 = vmatpush1.msra.mxu0 0.0
    %374 = vmatprep.subr.mxu0 0.0
    %375 = vmatpush1.msra.mxu0 0.0
    %376 = vmatprep.subr.mxu0 0.0
    %377 = vmatpush1.msra.mxu0 0.0
    %378 = vmatprep.subr.mxu0 0.0
    %379 = vmatpush1.msra.mxu0 0.0
    %380 = vmatprep.subr.mxu0 0.0
    %381 = vmatpush1.msra.mxu0 0.0
    %382 = vmatprep.subr.mxu0 0.0
    %383 = vmatpush1.msra.mxu0 0.0
    %384 = vmatprep.subr.mxu0 0.0
    %385 = vmatpush1.msra.mxu0 0.0
    %386 = vmatprep.subr.mxu0 0.0
    %387 = vmatpush1.msra.mxu0 0.0
    %388 = vmatprep.subr.mxu0 0.0
    %389 = vmatpush1.msra.mxu0 0.0
    %390 = vmatprep.subr.mxu0 0.0
    %391 = vmatpush1.msra.mxu0 0.0
    %392 = vmatprep.subr.mxu0 0.0
    %393 = vmatpush1.msra.mxu0 0.0
    %394 = vmatprep.subr.mxu0 0.0
    %395 = vmatpush1.msra.mxu0 0.0
    %396 = vmatprep.subr.mxu0 0.0
    %397 = vmatpush1.msra.mxu0 0.0
    %398 = vmatprep.subr.mxu0 0.0
    %399 = vmatpush1.msra.mxu0 0.0
    %400 = vmatprep.mubr.f32.mxu0 0.0
    %401 = vmatmul.mubr.f32.gmra.mrb[0].mxu0 %v334
    %v402 = vpop.f32.mrb[0].mxu0
    %v403 = vadd.f32 0.0, %v402
    %v404 = vpop.f32.mrb[0].mxu0
    %v405 = vadd.f32 0.0, %v404
    %406 = vdwg.mxu0
    %407 = vmatprep.subr.mxu0 %v304
    %408 = vmatpush1.msra.mxu0 %v303
    %409 = vmatprep.subr.mxu0 %v308
    %410 = vmatpush1.msra.mxu0 %v307
    %411 = vmatprep.subr.mxu0 %v312
    %412 = vmatpush1.msra.mxu0 %v311
    %413 = vmatprep.subr.mxu0 %v316
    %414 = vmatpush1.msra.mxu0 %v315
    %415 = vmatprep.subr.mxu0 %v320
    %416 = vmatpush1.msra.mxu0 %v319
    %417 = vmatprep.subr.mxu0 %v324
    %418 = vmatpush1.msra.mxu0 %v323
    %419 = vmatprep.subr.mxu0 %v328
    %420 = vmatpush1.msra.mxu0 %v327
    %421 = vmatprep.subr.mxu0 %v332
    %422 = vmatpush1.msra.mxu0 %v331
    %423 = vmatprep.subr.mxu0 0.0
    %424 = vmatpush1.msra.mxu0 0.0
    %425 = vmatprep.subr.mxu0 0.0
    %426 = vmatpush1.msra.mxu0 0.0
    %427 = vmatprep.subr.mxu0 0.0
    %428 = vmatpush1.msra.mxu0 0.0
    %429 = vmatprep.subr.mxu0 0.0
    %430 = vmatpush1.msra.mxu0 0.0
    %431 = vmatprep.subr.mxu0 0.0
    %432 = vmatpush1.msra.mxu0 0.0
    %433 = vmatprep.subr.mxu0 0.0
    %434 = vmatpush1.msra.mxu0 0.0
    %435 = vmatprep.subr.mxu0 0.0
    %436 = vmatpush1.msra.mxu0 0.0
    %437 = vmatprep.subr.mxu0 0.0
    %438 = vmatpush1.msra.mxu0 0.0
    %439 = vmatprep.subr.mxu0 0.0
    %440 = vmatpush1.msra.mxu0 0.0
    %441 = vmatprep.subr.mxu0 0.0
    %442 = vmatpush1.msra.mxu0 0.0
    %443 = vmatprep.subr.mxu0 0.0
    %444 = vmatpush1.msra.mxu0 0.0
    %445 = vmatprep.subr.mxu0 0.0
    %446 = vmatpush1.msra.mxu0 0.0
    %447 = vmatprep.subr.mxu0 0.0
    %448 = vmatpush1.msra.mxu0 0.0
    %449 = vmatprep.subr.mxu0 0.0
    %450 = vmatpush1.msra.mxu0 0.0
    %451 = vmatprep.subr.mxu0 0.0
    %452 = vmatpush1.msra.mxu0 0.0
    %453 = vmatprep.subr.mxu0 0.0
    %454 = vmatpush1.msra.mxu0 0.0
    %455 = vmatprep.subr.mxu0 0.0
    %456 = vmatpush1.msra.mxu0 0.0
    %457 = vmatprep.subr.mxu0 0.0
    %458 = vmatpush1.msra.mxu0 0.0
    %459 = vmatprep.subr.mxu0 0.0
    %460 = vmatpush1.msra.mxu0 0.0
    %461 = vmatprep.subr.mxu0 0.0
    %462 = vmatpush1.msra.mxu0 0.0
    %463 = vmatprep.subr.mxu0 0.0
    %464 = vmatpush1.msra.mxu0 0.0
    %465 = vmatprep.subr.mxu0 0.0
    %466 = vmatpush1.msra.mxu0 0.0
    %467 = vmatprep.subr.mxu0 0.0
    %468 = vmatpush1.msra.mxu0 0.0
    %469 = vmatprep.subr.mxu0 0.0
    %470 = vmatpush1.msra.mxu0 0.0
    %471 = vmatprep.mubr.f32.mxu0 0.0
    %472 = vmatmul.mubr.f32.gmra.mrb[0].mxu0 %v334
    %v473 = vpop.f32.mrb[0].mxu0
    %v474 = vadd.f32 0.0, %v473
    %v475 = vpop.f32.mrb[0].mxu0
    %v476 = vadd.f32 0.0, %v475
    %477 = vdwg.mxu0
    %v478 = vmul.f32 %v403, %v44
    %v479 = vmul.f32 %v405, %v44
    %v480 = vmul.f32 %v474, %v44
    %v481 = vmul.f32 %v476, %v44
    %v482 = vrot.slane %v478, 4
    %v483 = vadd.f32 %v478, %v482
    %v484 = vrot.slane %v483, 2
    %v485 = vadd.f32 %v483, %v484
    %v486 = vrot.slane %v485, 1
    %v487 = vadd.f32 %v485, %v486
    %v488 = vrot.slane %v479, 4
    %v489 = vadd.f32 %v479, %v488
    %v490 = vrot.slane %v489, 2
    %v491 = vadd.f32 %v489, %v490
    %v492 = vrot.slane %v491, 1
    %v493 = vadd.f32 %v491, %v492
    %v494 = vrot.slane %v480, 4
    %v495 = vadd.f32 %v480, %v494
    %v496 = vrot.slane %v495, 2
    %v497 = vadd.f32 %v495, %v496
    %v498 = vrot.slane %v497, 1
    %v499 = vadd.f32 %v497, %v498
    %v500 = vrot.slane %v481, 4
    %v501 = vadd.f32 %v481, %v500
    %v502 = vrot.slane %v501, 2
    %v503 = vadd.f32 %v501, %v502
    %v504 = vrot.slane %v503, 1
    %v505 = vadd.f32 %v503, %v504
    %v506 = vmul.f32 %v487, 0.5
    %v507 = vmul.f32 %v493, 0.5
    %v508 = vmul.f32 %v499, 0.5
    %v509 = vmul.f32 %v505, 0.5
    %v510 = vsub.f32 %v403, %v506
    %v511 = vsub.f32 %v405, %v507
    %v512 = vsub.f32 %v474, %v508
    %v513 = vsub.f32 %v476, %v509
    %v514 = vmul.f32 %v510, %v44
    %v515 = vmul.f32 %v511, %v44
    %v516 = vmul.f32 %v512, %v44
    %v517 = vmul.f32 %v513, %v44
    %v518 = vmul.f32 %v514, %v514
    %v519 = vmul.f32 %v515, %v515
    %v520 = vmul.f32 %v516, %v516
    %v521 = vmul.f32 %v517, %v517
    %v522 = vrot.slane %v518, 4
    %v523 = vadd.f32 %v518, %v522
    %v524 = vrot.slane %v523, 2
    %v525 = vadd.f32 %v523, %v524
    %v526 = vrot.slane %v525, 1
    %v527 = vadd.f32 %v525, %v526
    %v528 = vrot.slane %v519, 4
    %v529 = vadd.f32 %v519, %v528
    %v530 = vrot.slane %v529, 2
    %v531 = vadd.f32 %v529, %v530
    %v532 = vrot.slane %v531, 1
    %v533 = vadd.f32 %v531, %v532
    %v534 = vrot.slane %v520, 4
    %v535 = vadd.f32 %v520, %v534
    %v536 = vrot.slane %v535, 2
    %v537 = vadd.f32 %v535, %v536
    %v538 = vrot.slane %v537, 1
    %v539 = vadd.f32 %v537, %v538
    %v540 = vrot.slane %v521, 4
    %v541 = vadd.f32 %v521, %v540
    %v542 = vrot.slane %v541, 2
    %v543 = vadd.f32 %v541, %v542
    %v544 = vrot.slane %v543, 1
    %v545 = vadd.f32 %v543, %v544
    %v546 = vmul.f32 %v527, 0.5
    %v547 = vmul.f32 %v533, 0.5
    %v548 = vmul.f32 %v539, 0.5
    %v549 = vmul.f32 %v545, 0.5
    %v550 = vadd.f32 %v546, 1e-05
    %v551 = vadd.f32 %v547, 1e-05
    %v552 = vadd.f32 %v548, 1e-05
    %v553 = vadd.f32 %v549, 1e-05
    %v554 = vrsqrt.pop %v550
    %v555 = vrsqrt.pop %v551
    %v556 = vrsqrt.pop %v552
    %v557 = vrsqrt.pop %v553
    %v558 = vmul.f32 %v510, %v554
    %v559 = vmul.f32 %v511, %v555
    %v560 = vmul.f32 %v512, %v556
    %v561 = vmul.f32 %v513, %v557
    %v563 = vlaneseq
    %v564 = vshrl.u32 %v563, 7
    %v565 = vsub.s32 0, %v564
    %v566 = vrot.slane %v48, %v565
    %v567 = vlaneseq
    %v568 = vshrl.u32 %v567, 7
    %v569 = vsub.s32 1, %v568
    %v570 = vrot.slane %v48, %v569
    %v571 = vlaneseq
    %v572 = vshrl.u32 %v571, 7
    %v573 = vsub.s32 2, %v572
    %v574 = vrot.slane %v48, %v573
    %v575 = vlaneseq
    %v576 = vshrl.u32 %v575, 7
    %v577 = vsub.s32 3, %v576
    %v578 = vrot.slane %v48, %v577
    %v583 = vmul.f32 %v558, %v566
    %v584 = vmul.f32 %v559, %v570
    %v585 = vmul.f32 %v560, %v574
    %v586 = vmul.f32 %v561, %v578
    %v588 = vlaneseq
    %v589 = vshrl.u32 %v588, 7
    %v590 = vsub.s32 0, %v589
    %v591 = vrot.slane %v50, %v590
    %v592 = vlaneseq
    %v593 = vshrl.u32 %v592, 7
    %v594 = vsub.s32 1, %v593
    %v595 = vrot.slane %v50, %v594
    %v596 = vlaneseq
    %v597 = vshrl.u32 %v596, 7
    %v598 = vsub.s32 2, %v597
    %v599 = vrot.slane %v50, %v598
    %v600 = vlaneseq
    %v601 = vshrl.u32 %v600, 7
    %v602 = vsub.s32 3, %v601
    %v603 = vrot.slane %v50, %v602
    %v608 = vadd.f32 %v583, %v591
    %v609 = vadd.f32 %v584, %v595
    %v610 = vadd.f32 %v585, %v599
    %v611 = vadd.f32 %v586, %v603
    %v612 = vmax.f32 %v608, 0.0
    %v613 = vmax.f32 %v609, 0.0
    %v614 = vmax.f32 %v610, 0.0
    %v615 = vmax.f32 %v611, 0.0
    %v616 = vmul.f32 %v258, %v258
    %v617 = vmul.f32 %v616, 0.5
    %v618 = vmul.f32 %v296, %v296
    %v619 = vsub.f32 %v618, 1.0
    %v620 = vmul.f32 %v619, 0.5
    %v621 = vsub.f32 %v620, %v258
    %v622 = vsel %vm299, %v617, %v621
    %v623 = vmul.f32 %v622, %v44
    %v624 = vsel %vm262, %v623, 0.0
    %625 = vadd.xlane.f32.xlu0 %v624
    %v626 = vpop.xlane.xlu0 %625
    %v627 = vrot.slane %v626, 4
    %v628 = vadd.f32 %v626, %v627
    %v629 = vrot.slane %v628, 2
    %v630 = vadd.f32 %v628, %v629
    %v631 = vrot.slane %v630, 1
    %v632 = vadd.f32 %v630, %v631
    %s633 = vtos %v632
    %v634 = vrcp.pop 64.0
    %s635 = vtos %v634
    %s636 = smul.f32 %s633, %s635
    %s637 = scalar_lea.smem [#allocation7], 0
    %638 = sst [smem:[%s637]] %s636
    %s639 = smul.u32 8, 64
    %s640 = smul.u32 %s639, 4
    %s641 = sshll.u32 %s640, 4
    %642 = dma.done [#allocation3], %s641
    %v643 = vld [vmem:[#allocation2] sm:$0xff]
    %v644 = vld [vmem:[#allocation2 + $0x8] sm:$0xff]
    %v645 = vld [vmem:[#allocation2 + $0x10] sm:$0xff]
    %v646 = vld [vmem:[#allocation2 + $0x18] sm:$0xff]
    %v647 = vld [vmem:[#allocation2 + $0x20] sm:$0xff]
    %v648 = vld [vmem:[#allocation2 + $0x28] sm:$0xff]
    %v649 = vld [vmem:[#allocation2 + $0x30] sm:$0xff]
    %v650 = vld [vmem:[#allocation2 + $0x38] sm:$0xff]
    %v651 = vld [vmem:[#allocation2 + $0x40] sm:$0xff]
    %v652 = vld [vmem:[#allocation2 + $0x48] sm:$0xff]
    %v653 = vld [vmem:[#allocation2 + $0x50] sm:$0xff]
    %v654 = vld [vmem:[#allocation2 + $0x58] sm:$0xff]
    %v655 = vld [vmem:[#allocation2 + $0x60] sm:$0xff]
    %v656 = vld [vmem:[#allocation2 + $0x68] sm:$0xff]
    %v657 = vld [vmem:[#allocation2 + $0x70] sm:$0xff]
    %v658 = vld [vmem:[#allocation2 + $0x78] sm:$0xff]
    %v659 = vld [vmem:[#allocation2 + $0x80] sm:$0xff]
    %v660 = vld [vmem:[#allocation2 + $0x88] sm:$0xff]
    %v661 = vld [vmem:[#allocation2 + $0x90] sm:$0xff]
    %v662 = vld [vmem:[#allocation2 + $0x98] sm:$0xff]
    %v663 = vld [vmem:[#allocation2 + $0xa0] sm:$0xff]
    %v664 = vld [vmem:[#allocation2 + $0xa8] sm:$0xff]
    %v665 = vld [vmem:[#allocation2 + $0xb0] sm:$0xff]
    %v666 = vld [vmem:[#allocation2 + $0xb8] sm:$0xff]
    %v667 = vld [vmem:[#allocation2 + $0xc0] sm:$0xff]
    %v668 = vld [vmem:[#allocation2 + $0xc8] sm:$0xff]
    %v669 = vld [vmem:[#allocation2 + $0xd0] sm:$0xff]
    %v670 = vld [vmem:[#allocation2 + $0xd8] sm:$0xff]
    %v671 = vld [vmem:[#allocation2 + $0xe0] sm:$0xff]
    %v672 = vld [vmem:[#allocation2 + $0xe8] sm:$0xff]
    %v673 = vld [vmem:[#allocation2 + $0xf0] sm:$0xff]
    %v674 = vld [vmem:[#allocation2 + $0xf8] sm:$0xff]
    %v675 = vld [vmem:[#allocation2 + $0x100] sm:$0xff]
    %v676 = vld [vmem:[#allocation2 + $0x108] sm:$0xff]
    %v677 = vld [vmem:[#allocation2 + $0x110] sm:$0xff]
    %v678 = vld [vmem:[#allocation2 + $0x118] sm:$0xff]
    %v679 = vld [vmem:[#allocation2 + $0x120] sm:$0xff]
    %v680 = vld [vmem:[#allocation2 + $0x128] sm:$0xff]
    %v681 = vld [vmem:[#allocation2 + $0x130] sm:$0xff]
    %v682 = vld [vmem:[#allocation2 + $0x138] sm:$0xff]
    %v683 = vld [vmem:[#allocation2 + $0x140] sm:$0xff]
    %v684 = vld [vmem:[#allocation2 + $0x148] sm:$0xff]
    %v685 = vld [vmem:[#allocation2 + $0x150] sm:$0xff]
    %v686 = vld [vmem:[#allocation2 + $0x158] sm:$0xff]
    %v687 = vld [vmem:[#allocation2 + $0x160] sm:$0xff]
    %v688 = vld [vmem:[#allocation2 + $0x168] sm:$0xff]
    %v689 = vld [vmem:[#allocation2 + $0x170] sm:$0xff]
    %v690 = vld [vmem:[#allocation2 + $0x178] sm:$0xff]
    %v691 = vld [vmem:[#allocation2 + $0x180] sm:$0xff]
    %v692 = vld [vmem:[#allocation2 + $0x188] sm:$0xff]
    %v693 = vld [vmem:[#allocation2 + $0x190] sm:$0xff]
    %v694 = vld [vmem:[#allocation2 + $0x198] sm:$0xff]
    %v695 = vld [vmem:[#allocation2 + $0x1a0] sm:$0xff]
    %v696 = vld [vmem:[#allocation2 + $0x1a8] sm:$0xff]
    %v697 = vld [vmem:[#allocation2 + $0x1b0] sm:$0xff]
    %v698 = vld [vmem:[#allocation2 + $0x1b8] sm:$0xff]
    %v699 = vld [vmem:[#allocation2 + $0x1c0] sm:$0xff]
    %v700 = vld [vmem:[#allocation2 + $0x1c8] sm:$0xff]
    %v701 = vld [vmem:[#allocation2 + $0x1d0] sm:$0xff]
    %v702 = vld [vmem:[#allocation2 + $0x1d8] sm:$0xff]
    %v703 = vld [vmem:[#allocation2 + $0x1e0] sm:$0xff]
    %v704 = vld [vmem:[#allocation2 + $0x1e8] sm:$0xff]
    %v705 = vld [vmem:[#allocation2 + $0x1f0] sm:$0xff]
    %v706 = vld [vmem:[#allocation2 + $0x1f8] sm:$0xff]
    %v707 = vld [vmem:[#allocation2 + $0x200] sm:$0xff]
    %v708 = vld [vmem:[#allocation2 + $0x208] sm:$0xff]
    %v709 = vld [vmem:[#allocation2 + $0x210] sm:$0xff]
    %v710 = vld [vmem:[#allocation2 + $0x218] sm:$0xff]
    %v711 = vld [vmem:[#allocation2 + $0x220] sm:$0xff]
    %v712 = vld [vmem:[#allocation2 + $0x228] sm:$0xff]
    %v713 = vld [vmem:[#allocation2 + $0x230] sm:$0xff]
    %v714 = vld [vmem:[#allocation2 + $0x238] sm:$0xff]
    %v715 = vld [vmem:[#allocation2 + $0x240] sm:$0xff]
    %v716 = vld [vmem:[#allocation2 + $0x248] sm:$0xff]
    %v717 = vld [vmem:[#allocation2 + $0x250] sm:$0xff]
    %v718 = vld [vmem:[#allocation2 + $0x258] sm:$0xff]
    %v719 = vld [vmem:[#allocation2 + $0x260] sm:$0xff]
    %v720 = vld [vmem:[#allocation2 + $0x268] sm:$0xff]
    %v721 = vld [vmem:[#allocation2 + $0x270] sm:$0xff]
    %v722 = vld [vmem:[#allocation2 + $0x278] sm:$0xff]
    %v723 = vld [vmem:[#allocation2 + $0x280] sm:$0xff]
    %v724 = vld [vmem:[#allocation2 + $0x288] sm:$0xff]
    %v725 = vld [vmem:[#allocation2 + $0x290] sm:$0xff]
    %v726 = vld [vmem:[#allocation2 + $0x298] sm:$0xff]
    %v727 = vld [vmem:[#allocation2 + $0x2a0] sm:$0xff]
    %v728 = vld [vmem:[#allocation2 + $0x2a8] sm:$0xff]
    %v729 = vld [vmem:[#allocation2 + $0x2b0] sm:$0xff]
    %v730 = vld [vmem:[#allocation2 + $0x2b8] sm:$0xff]
    %v731 = vld [vmem:[#allocation2 + $0x2c0] sm:$0xff]
    %v732 = vld [vmem:[#allocation2 + $0x2c8] sm:$0xff]
    %v733 = vld [vmem:[#allocation2 + $0x2d0] sm:$0xff]
    %v734 = vld [vmem:[#allocation2 + $0x2d8] sm:$0xff]
    %v735 = vld [vmem:[#allocation2 + $0x2e0] sm:$0xff]
    %v736 = vld [vmem:[#allocation2 + $0x2e8] sm:$0xff]
    %v737 = vld [vmem:[#allocation2 + $0x2f0] sm:$0xff]
    %v738 = vld [vmem:[#allocation2 + $0x2f8] sm:$0xff]
    %v739 = vld [vmem:[#allocation2 + $0x300] sm:$0xff]
    %v740 = vld [vmem:[#allocation2 + $0x308] sm:$0xff]
    %v741 = vld [vmem:[#allocation2 + $0x310] sm:$0xff]
    %v742 = vld [vmem:[#allocation2 + $0x318] sm:$0xff]
    %v743 = vld [vmem:[#allocation2 + $0x320] sm:$0xff]
    %v744 = vld [vmem:[#allocation2 + $0x328] sm:$0xff]
    %v745 = vld [vmem:[#allocation2 + $0x330] sm:$0xff]
    %v746 = vld [vmem:[#allocation2 + $0x338] sm:$0xff]
    %v747 = vld [vmem:[#allocation2 + $0x340] sm:$0xff]
    %v748 = vld [vmem:[#allocation2 + $0x348] sm:$0xff]
    %v749 = vld [vmem:[#allocation2 + $0x350] sm:$0xff]
    %v750 = vld [vmem:[#allocation2 + $0x358] sm:$0xff]
    %v751 = vld [vmem:[#allocation2 + $0x360] sm:$0xff]
    %v752 = vld [vmem:[#allocation2 + $0x368] sm:$0xff]
    %v753 = vld [vmem:[#allocation2 + $0x370] sm:$0xff]
    %v754 = vld [vmem:[#allocation2 + $0x378] sm:$0xff]
    %v755 = vld [vmem:[#allocation2 + $0x380] sm:$0xff]
    %v756 = vld [vmem:[#allocation2 + $0x388] sm:$0xff]
    %v757 = vld [vmem:[#allocation2 + $0x390] sm:$0xff]
    %v758 = vld [vmem:[#allocation2 + $0x398] sm:$0xff]
    %v759 = vld [vmem:[#allocation2 + $0x3a0] sm:$0xff]
    %v760 = vld [vmem:[#allocation2 + $0x3a8] sm:$0xff]
    %v761 = vld [vmem:[#allocation2 + $0x3b0] sm:$0xff]
    %v762 = vld [vmem:[#allocation2 + $0x3b8] sm:$0xff]
    %v763 = vld [vmem:[#allocation2 + $0x3c0] sm:$0xff]
    %v764 = vld [vmem:[#allocation2 + $0x3c8] sm:$0xff]
    %v765 = vld [vmem:[#allocation2 + $0x3d0] sm:$0xff]
    %v766 = vld [vmem:[#allocation2 + $0x3d8] sm:$0xff]
    %v767 = vld [vmem:[#allocation2 + $0x3e0] sm:$0xff]
    %v768 = vld [vmem:[#allocation2 + $0x3e8] sm:$0xff]
    %v769 = vld [vmem:[#allocation2 + $0x3f0] sm:$0xff]
    %v770 = vld [vmem:[#allocation2 + $0x3f8] sm:$0xff]
    %v771 = vld [vmem:[#allocation2 + $0x400] sm:$0xff]
    %v772 = vld [vmem:[#allocation2 + $0x408] sm:$0xff]
    %v773 = vld [vmem:[#allocation2 + $0x410] sm:$0xff]
    %v774 = vld [vmem:[#allocation2 + $0x418] sm:$0xff]
    %v775 = vld [vmem:[#allocation2 + $0x420] sm:$0xff]
    %v776 = vld [vmem:[#allocation2 + $0x428] sm:$0xff]
    %v777 = vld [vmem:[#allocation2 + $0x430] sm:$0xff]
    %v778 = vld [vmem:[#allocation2 + $0x438] sm:$0xff]
    %v779 = vld [vmem:[#allocation2 + $0x440] sm:$0xff]
    %v780 = vld [vmem:[#allocation2 + $0x448] sm:$0xff]
    %v781 = vld [vmem:[#allocation2 + $0x450] sm:$0xff]
    %v782 = vld [vmem:[#allocation2 + $0x458] sm:$0xff]
    %v783 = vld [vmem:[#allocation2 + $0x460] sm:$0xff]
    %v784 = vld [vmem:[#allocation2 + $0x468] sm:$0xff]
    %v785 = vld [vmem:[#allocation2 + $0x470] sm:$0xff]
    %v786 = vld [vmem:[#allocation2 + $0x478] sm:$0xff]
    %v787 = vld [vmem:[#allocation2 + $0x480] sm:$0xff]
    %v788 = vld [vmem:[#allocation2 + $0x488] sm:$0xff]
    %v789 = vld [vmem:[#allocation2 + $0x490] sm:$0xff]
    %v790 = vld [vmem:[#allocation2 + $0x498] sm:$0xff]
    %v791 = vld [vmem:[#allocation2 + $0x4a0] sm:$0xff]
    %v792 = vld [vmem:[#allocation2 + $0x4a8] sm:$0xff]
    %v793 = vld [vmem:[#allocation2 + $0x4b0] sm:$0xff]
    %v794 = vld [vmem:[#allocation2 + $0x4b8] sm:$0xff]
    %v795 = vld [vmem:[#allocation2 + $0x4c0] sm:$0xff]
    %v796 = vld [vmem:[#allocation2 + $0x4c8] sm:$0xff]
    %v797 = vld [vmem:[#allocation2 + $0x4d0] sm:$0xff]
    %v798 = vld [vmem:[#allocation2 + $0x4d8] sm:$0xff]
    %v799 = vld [vmem:[#allocation2 + $0x4e0] sm:$0xff]
    %v800 = vld [vmem:[#allocation2 + $0x4e8] sm:$0xff]
    %v801 = vld [vmem:[#allocation2 + $0x4f0] sm:$0xff]
    %v802 = vld [vmem:[#allocation2 + $0x4f8] sm:$0xff]
    %v803 = vld [vmem:[#allocation2 + $0x500] sm:$0xff]
    %v804 = vld [vmem:[#allocation2 + $0x508] sm:$0xff]
    %v805 = vld [vmem:[#allocation2 + $0x510] sm:$0xff]
    %v806 = vld [vmem:[#allocation2 + $0x518] sm:$0xff]
    %v807 = vld [vmem:[#allocation2 + $0x520] sm:$0xff]
    %v808 = vld [vmem:[#allocation2 + $0x528] sm:$0xff]
    %v809 = vld [vmem:[#allocation2 + $0x530] sm:$0xff]
    %v810 = vld [vmem:[#allocation2 + $0x538] sm:$0xff]
    %v811 = vld [vmem:[#allocation2 + $0x540] sm:$0xff]
    %v812 = vld [vmem:[#allocation2 + $0x548] sm:$0xff]
    %v813 = vld [vmem:[#allocation2 + $0x550] sm:$0xff]
    %v814 = vld [vmem:[#allocation2 + $0x558] sm:$0xff]
    %v815 = vld [vmem:[#allocation2 + $0x560] sm:$0xff]
    %v816 = vld [vmem:[#allocation2 + $0x568] sm:$0xff]
    %v817 = vld [vmem:[#allocation2 + $0x570] sm:$0xff]
    %v818 = vld [vmem:[#allocation2 + $0x578] sm:$0xff]
    %v819 = vld [vmem:[#allocation2 + $0x580] sm:$0xff]
    %v820 = vld [vmem:[#allocation2 + $0x588] sm:$0xff]
    %v821 = vld [vmem:[#allocation2 + $0x590] sm:$0xff]
    %v822 = vld [vmem:[#allocation2 + $0x598] sm:$0xff]
    %v823 = vld [vmem:[#allocation2 + $0x5a0] sm:$0xff]
    %v824 = vld [vmem:[#allocation2 + $0x5a8] sm:$0xff]
    %v825 = vld [vmem:[#allocation2 + $0x5b0] sm:$0xff]
    %v826 = vld [vmem:[#allocation2 + $0x5b8] sm:$0xff]
    %v827 = vld [vmem:[#allocation2 + $0x5c0] sm:$0xff]
    %v828 = vld [vmem:[#allocation2 + $0x5c8] sm:$0xff]
    %v829 = vld [vmem:[#allocation2 + $0x5d0] sm:$0xff]
    %v830 = vld [vmem:[#allocation2 + $0x5d8] sm:$0xff]
    %v831 = vld [vmem:[#allocation2 + $0x5e0] sm:$0xff]
    %v832 = vld [vmem:[#allocation2 + $0x5e8] sm:$0xff]
    %v833 = vld [vmem:[#allocation2 + $0x5f0] sm:$0xff]
    %v834 = vld [vmem:[#allocation2 + $0x5f8] sm:$0xff]
    %v835 = vld [vmem:[#allocation2 + $0x600] sm:$0xff]
    %v836 = vld [vmem:[#allocation2 + $0x608] sm:$0xff]
    %v837 = vld [vmem:[#allocation2 + $0x610] sm:$0xff]
    %v838 = vld [vmem:[#allocation2 + $0x618] sm:$0xff]
    %v839 = vld [vmem:[#allocation2 + $0x620] sm:$0xff]
    %v840 = vld [vmem:[#allocation2 + $0x628] sm:$0xff]
    %v841 = vld [vmem:[#allocation2 + $0x630] sm:$0xff]
    %v842 = vld [vmem:[#allocation2 + $0x638] sm:$0xff]
    %v843 = vld [vmem:[#allocation2 + $0x640] sm:$0xff]
    %v844 = vld [vmem:[#allocation2 + $0x648] sm:$0xff]
    %v845 = vld [vmem:[#allocation2 + $0x650] sm:$0xff]
    %v846 = vld [vmem:[#allocation2 + $0x658] sm:$0xff]
    %v847 = vld [vmem:[#allocation2 + $0x660] sm:$0xff]
    %v848 = vld [vmem:[#allocation2 + $0x668] sm:$0xff]
    %v849 = vld [vmem:[#allocation2 + $0x670] sm:$0xff]
    %v850 = vld [vmem:[#allocation2 + $0x678] sm:$0xff]
    %v851 = vld [vmem:[#allocation2 + $0x680] sm:$0xff]
    %v852 = vld [vmem:[#allocation2 + $0x688] sm:$0xff]
    %v853 = vld [vmem:[#allocation2 + $0x690] sm:$0xff]
    %v854 = vld [vmem:[#allocation2 + $0x698] sm:$0xff]
    %v855 = vld [vmem:[#allocation2 + $0x6a0] sm:$0xff]
    %v856 = vld [vmem:[#allocation2 + $0x6a8] sm:$0xff]
    %v857 = vld [vmem:[#allocation2 + $0x6b0] sm:$0xff]
    %v858 = vld [vmem:[#allocation2 + $0x6b8] sm:$0xff]
    %v859 = vld [vmem:[#allocation2 + $0x6c0] sm:$0xff]
    %v860 = vld [vmem:[#allocation2 + $0x6c8] sm:$0xff]
    %v861 = vld [vmem:[#allocation2 + $0x6d0] sm:$0xff]
    %v862 = vld [vmem:[#allocation2 + $0x6d8] sm:$0xff]
    %v863 = vld [vmem:[#allocation2 + $0x6e0] sm:$0xff]
    %v864 = vld [vmem:[#allocation2 + $0x6e8] sm:$0xff]
    %v865 = vld [vmem:[#allocation2 + $0x6f0] sm:$0xff]
    %v866 = vld [vmem:[#allocation2 + $0x6f8] sm:$0xff]
    %v867 = vld [vmem:[#allocation2 + $0x700] sm:$0xff]
    %v868 = vld [vmem:[#allocation2 + $0x708] sm:$0xff]
    %v869 = vld [vmem:[#allocation2 + $0x710] sm:$0xff]
    %v870 = vld [vmem:[#allocation2 + $0x718] sm:$0xff]
    %v871 = vld [vmem:[#allocation2 + $0x720] sm:$0xff]
    %v872 = vld [vmem:[#allocation2 + $0x728] sm:$0xff]
    %v873 = vld [vmem:[#allocation2 + $0x730] sm:$0xff]
    %v874 = vld [vmem:[#allocation2 + $0x738] sm:$0xff]
    %v875 = vld [vmem:[#allocation2 + $0x740] sm:$0xff]
    %v876 = vld [vmem:[#allocation2 + $0x748] sm:$0xff]
    %v877 = vld [vmem:[#allocation2 + $0x750] sm:$0xff]
    %v878 = vld [vmem:[#allocation2 + $0x758] sm:$0xff]
    %v879 = vld [vmem:[#allocation2 + $0x760] sm:$0xff]
    %v880 = vld [vmem:[#allocation2 + $0x768] sm:$0xff]
    %v881 = vld [vmem:[#allocation2 + $0x770] sm:$0xff]
    %v882 = vld [vmem:[#allocation2 + $0x778] sm:$0xff]
    %v883 = vld [vmem:[#allocation2 + $0x780] sm:$0xff]
    %v884 = vld [vmem:[#allocation2 + $0x788] sm:$0xff]
    %v885 = vld [vmem:[#allocation2 + $0x790] sm:$0xff]
    %v886 = vld [vmem:[#allocation2 + $0x798] sm:$0xff]
    %v887 = vld [vmem:[#allocation2 + $0x7a0] sm:$0xff]
    %v888 = vld [vmem:[#allocation2 + $0x7a8] sm:$0xff]
    %v889 = vld [vmem:[#allocation2 + $0x7b0] sm:$0xff]
    %v890 = vld [vmem:[#allocation2 + $0x7b8] sm:$0xff]
    %v891 = vld [vmem:[#allocation2 + $0x7c0] sm:$0xff]
    %v892 = vld [vmem:[#allocation2 + $0x7c8] sm:$0xff]
    %v893 = vld [vmem:[#allocation2 + $0x7d0] sm:$0xff]
    %v894 = vld [vmem:[#allocation2 + $0x7d8] sm:$0xff]
    %v895 = vld [vmem:[#allocation2 + $0x7e0] sm:$0xff]
    %v896 = vld [vmem:[#allocation2 + $0x7e8] sm:$0xff]
    %v897 = vld [vmem:[#allocation2 + $0x7f0] sm:$0xff]
    %v898 = vld [vmem:[#allocation2 + $0x7f8] sm:$0xff]
    %v900 = vlaneseq
    %v901 = vshrl.u32 %v900, 7
    %v902 = vsub.s32 0, %v901
    %v903 = vrot.slane %v52, %v902
    %v904 = vlaneseq
    %v905 = vshrl.u32 %v904, 7
    %v906 = vsub.s32 1, %v905
    %v907 = vrot.slane %v52, %v906
    %v908 = vlaneseq
    %v909 = vshrl.u32 %v908, 7
    %v910 = vsub.s32 2, %v909
    %v911 = vrot.slane %v52, %v910
    %v912 = vlaneseq
    %v913 = vshrl.u32 %v912, 7
    %v914 = vsub.s32 3, %v913
    %v915 = vrot.slane %v52, %v914
    %920 = vmatprep.subr.mxu0 %v644
    %921 = vmatpush1.msra.mxu0 %v643
    %922 = vmatprep.subr.mxu0 %v648
    %923 = vmatpush1.msra.mxu0 %v647
    %924 = vmatprep.subr.mxu0 %v652
    %925 = vmatpush1.msra.mxu0 %v651
    %926 = vmatprep.subr.mxu0 %v656
    %927 = vmatpush1.msra.mxu0 %v655
    %928 = vmatprep.subr.mxu0 %v660
    %929 = vmatpush1.msra.mxu0 %v659
    %930 = vmatprep.subr.mxu0 %v664
    %931 = vmatpush1.msra.mxu0 %v663
    %932 = vmatprep.subr.mxu0 %v668
    %933 = vmatpush1.msra.mxu0 %v667
    %934 = vmatprep.subr.mxu0 %v672
    %935 = vmatpush1.msra.mxu0 %v671
    %936 = vmatprep.subr.mxu0 %v676
    %937 = vmatpush1.msra.mxu0 %v675
    %938 = vmatprep.subr.mxu0 %v680
    %939 = vmatpush1.msra.mxu0 %v679
    %940 = vmatprep.subr.mxu0 %v684
    %941 = vmatpush1.msra.mxu0 %v683
    %942 = vmatprep.subr.mxu0 %v688
    %943 = vmatpush1.msra.mxu0 %v687
    %944 = vmatprep.subr.mxu0 %v692
    %945 = vmatpush1.msra.mxu0 %v691
    %946 = vmatprep.subr.mxu0 %v696
    %947 = vmatpush1.msra.mxu0 %v695
    %948 = vmatprep.subr.mxu0 %v700
    %949 = vmatpush1.msra.mxu0 %v699
    %950 = vmatprep.subr.mxu0 %v704
    %951 = vmatpush1.msra.mxu0 %v703
    %952 = vmatprep.subr.mxu0 %v708
    %953 = vmatpush1.msra.mxu0 %v707
    %954 = vmatprep.subr.mxu0 %v712
    %955 = vmatpush1.msra.mxu0 %v711
    %956 = vmatprep.subr.mxu0 %v716
    %957 = vmatpush1.msra.mxu0 %v715
    %958 = vmatprep.subr.mxu0 %v720
    %959 = vmatpush1.msra.mxu0 %v719
    %960 = vmatprep.subr.mxu0 %v724
    %961 = vmatpush1.msra.mxu0 %v723
    %962 = vmatprep.subr.mxu0 %v728
    %963 = vmatpush1.msra.mxu0 %v727
    %964 = vmatprep.subr.mxu0 %v732
    %965 = vmatpush1.msra.mxu0 %v731
    %966 = vmatprep.subr.mxu0 %v736
    %967 = vmatpush1.msra.mxu0 %v735
    %968 = vmatprep.subr.mxu0 %v740
    %969 = vmatpush1.msra.mxu0 %v739
    %970 = vmatprep.subr.mxu0 %v744
    %971 = vmatpush1.msra.mxu0 %v743
    %972 = vmatprep.subr.mxu0 %v748
    %973 = vmatpush1.msra.mxu0 %v747
    %974 = vmatprep.subr.mxu0 %v752
    %975 = vmatpush1.msra.mxu0 %v751
    %976 = vmatprep.subr.mxu0 %v756
    %977 = vmatpush1.msra.mxu0 %v755
    %978 = vmatprep.subr.mxu0 %v760
    %979 = vmatpush1.msra.mxu0 %v759
    %980 = vmatprep.subr.mxu0 %v764
    %981 = vmatpush1.msra.mxu0 %v763
    %982 = vmatprep.subr.mxu0 %v768
    %983 = vmatpush1.msra.mxu0 %v767
    %984 = vmatprep.mubr.f32.mxu0 %v613
    %985 = vmatmul.mubr.f32.gmra.mrb[0].mxu0 %v612
    %v986 = vpop.f32.mrb[0].mxu0
    %v987 = vadd.f32 %v903, %v986
    %v988 = vpop.f32.mrb[0].mxu0
    %v989 = vadd.f32 %v907, %v988
    %990 = vdwg.mxu0
    %991 = vmatprep.subr.mxu0 %v772
    %992 = vmatpush1.msra.mxu0 %v771
    %993 = vmatprep.subr.mxu0 %v776
    %994 = vmatpush1.msra.mxu0 %v775
    %995 = vmatprep.subr.mxu0 %v780
    %996 = vmatpush1.msra.mxu0 %v779
    %997 = vmatprep.subr.mxu0 %v784
    %998 = vmatpush1.msra.mxu0 %v783
    %999 = vmatprep.subr.mxu0 %v788
    %1000 = vmatpush1.msra.mxu0 %v787
    %1001 = vmatprep.subr.mxu0 %v792
    %1002 = vmatpush1.msra.mxu0 %v791
    %1003 = vmatprep.subr.mxu0 %v796
    %1004 = vmatpush1.msra.mxu0 %v795
    %1005 = vmatprep.subr.mxu0 %v800
    %1006 = vmatpush1.msra.mxu0 %v799
    %1007 = vmatprep.subr.mxu0 %v804
    %1008 = vmatpush1.msra.mxu0 %v803
    %1009 = vmatprep.subr.mxu0 %v808
    %1010 = vmatpush1.msra.mxu0 %v807
    %1011 = vmatprep.subr.mxu0 %v812
    %1012 = vmatpush1.msra.mxu0 %v811
    %1013 = vmatprep.subr.mxu0 %v816
    %1014 = vmatpush1.msra.mxu0 %v815
    %1015 = vmatprep.subr.mxu0 %v820
    %1016 = vmatpush1.msra.mxu0 %v819
    %1017 = vmatprep.subr.mxu0 %v824
    %1018 = vmatpush1.msra.mxu0 %v823
    %1019 = vmatprep.subr.mxu0 %v828
    %1020 = vmatpush1.msra.mxu0 %v827
    %1021 = vmatprep.subr.mxu0 %v832
    %1022 = vmatpush1.msra.mxu0 %v831
    %1023 = vmatprep.subr.mxu0 %v836
    %1024 = vmatpush1.msra.mxu0 %v835
    %1025 = vmatprep.subr.mxu0 %v840
    %1026 = vmatpush1.msra.mxu0 %v839
    %1027 = vmatprep.subr.mxu0 %v844
    %1028 = vmatpush1.msra.mxu0 %v843
    %1029 = vmatprep.subr.mxu0 %v848
    %1030 = vmatpush1.msra.mxu0 %v847
    %1031 = vmatprep.subr.mxu0 %v852
    %1032 = vmatpush1.msra.mxu0 %v851
    %1033 = vmatprep.subr.mxu0 %v856
    %1034 = vmatpush1.msra.mxu0 %v855
    %1035 = vmatprep.subr.mxu0 %v860
    %1036 = vmatpush1.msra.mxu0 %v859
    %1037 = vmatprep.subr.mxu0 %v864
    %1038 = vmatpush1.msra.mxu0 %v863
    %1039 = vmatprep.subr.mxu0 %v868
    %1040 = vmatpush1.msra.mxu0 %v867
    %1041 = vmatprep.subr.mxu0 %v872
    %1042 = vmatpush1.msra.mxu0 %v871
    %1043 = vmatprep.subr.mxu0 %v876
    %1044 = vmatpush1.msra.mxu0 %v875
    %1045 = vmatprep.subr.mxu0 %v880
    %1046 = vmatpush1.msra.mxu0 %v879
    %1047 = vmatprep.subr.mxu0 %v884
    %1048 = vmatpush1.msra.mxu0 %v883
    %1049 = vmatprep.subr.mxu0 %v888
    %1050 = vmatpush1.msra.mxu0 %v887
    %1051 = vmatprep.subr.mxu0 %v892
    %1052 = vmatpush1.msra.mxu0 %v891
    %1053 = vmatprep.subr.mxu0 %v896
    %1054 = vmatpush1.msra.mxu0 %v895
    %1055 = vmatprep.mubr.f32.mxu0 %v615
    %1056 = vmatmul.mubr.f32.gmra.mrb[0].mxu0 %v614
    %v1057 = vpop.f32.mrb[0].mxu0
    %v1058 = vadd.f32 %v987, %v1057
    %v1059 = vpop.f32.mrb[0].mxu0
    %v1060 = vadd.f32 %v989, %v1059
    %1061 = vdwg.mxu0
    %1062 = vmatprep.subr.mxu0 %v646
    %1063 = vmatpush1.msra.mxu0 %v645
    %1064 = vmatprep.subr.mxu0 %v650
    %1065 = vmatpush1.msra.mxu0 %v649
    %1066 = vmatprep.subr.mxu0 %v654
    %1067 = vmatpush1.msra.mxu0 %v653
    %1068 = vmatprep.subr.mxu0 %v658
    %1069 = vmatpush1.msra.mxu0 %v657
    %1070 = vmatprep.subr.mxu0 %v662
    %1071 = vmatpush1.msra.mxu0 %v661
    %1072 = vmatprep.subr.mxu0 %v666
    %1073 = vmatpush1.msra.mxu0 %v665
    %1074 = vmatprep.subr.mxu0 %v670
    %1075 = vmatpush1.msra.mxu0 %v669
    %1076 = vmatprep.subr.mxu0 %v674
    %1077 = vmatpush1.msra.mxu0 %v673
    %1078 = vmatprep.subr.mxu0 %v678
    %1079 = vmatpush1.msra.mxu0 %v677
    %1080 = vmatprep.subr.mxu0 %v682
    %1081 = vmatpush1.msra.mxu0 %v681
    %1082 = vmatprep.subr.mxu0 %v686
    %1083 = vmatpush1.msra.mxu0 %v685
    %1084 = vmatprep.subr.mxu0 %v690
    %1085 = vmatpush1.msra.mxu0 %v689
    %1086 = vmatprep.subr.mxu0 %v694
    %1087 = vmatpush1.msra.mxu0 %v693
    %1088 = vmatprep.subr.mxu0 %v698
    %1089 = vmatpush1.msra.mxu0 %v697
    %1090 = vmatprep.subr.mxu0 %v702
    %1091 = vmatpush1.msra.mxu0 %v701
    %1092 = vmatprep.subr.mxu0 %v706
    %1093 = vmatpush1.msra.mxu0 %v705
    %1094 = vmatprep.subr.mxu0 %v710
    %1095 = vmatpush1.msra.mxu0 %v709
    %1096 = vmatprep.subr.mxu0 %v714
    %1097 = vmatpush1.msra.mxu0 %v713
    %1098 = vmatprep.subr.mxu0 %v718
    %1099 = vmatpush1.msra.mxu0 %v717
    %1100 = vmatprep.subr.mxu0 %v722
    %1101 = vmatpush1.msra.mxu0 %v721
    %1102 = vmatprep.subr.mxu0 %v726
    %1103 = vmatpush1.msra.mxu0 %v725
    %1104 = vmatprep.subr.mxu0 %v730
    %1105 = vmatpush1.msra.mxu0 %v729
    %1106 = vmatprep.subr.mxu0 %v734
    %1107 = vmatpush1.msra.mxu0 %v733
    %1108 = vmatprep.subr.mxu0 %v738
    %1109 = vmatpush1.msra.mxu0 %v737
    %1110 = vmatprep.subr.mxu0 %v742
    %1111 = vmatpush1.msra.mxu0 %v741
    %1112 = vmatprep.subr.mxu0 %v746
    %1113 = vmatpush1.msra.mxu0 %v745
    %1114 = vmatprep.subr.mxu0 %v750
    %1115 = vmatpush1.msra.mxu0 %v749
    %1116 = vmatprep.subr.mxu0 %v754
    %1117 = vmatpush1.msra.mxu0 %v753
    %1118 = vmatprep.subr.mxu0 %v758
    %1119 = vmatpush1.msra.mxu0 %v757
    %1120 = vmatprep.subr.mxu0 %v762
    %1121 = vmatpush1.msra.mxu0 %v761
    %1122 = vmatprep.subr.mxu0 %v766
    %1123 = vmatpush1.msra.mxu0 %v765
    %1124 = vmatprep.subr.mxu0 %v770
    %1125 = vmatpush1.msra.mxu0 %v769
    %1126 = vmatprep.mubr.f32.mxu0 %v613
    %1127 = vmatmul.mubr.f32.gmra.mrb[0].mxu0 %v612
    %v1128 = vpop.f32.mrb[0].mxu0
    %v1129 = vadd.f32 %v911, %v1128
    %v1130 = vpop.f32.mrb[0].mxu0
    %v1131 = vadd.f32 %v915, %v1130
    %1132 = vdwg.mxu0
    %1133 = vmatprep.subr.mxu0 %v774
    %1134 = vmatpush1.msra.mxu0 %v773
    %1135 = vmatprep.subr.mxu0 %v778
    %1136 = vmatpush1.msra.mxu0 %v777
    %1137 = vmatprep.subr.mxu0 %v782
    %1138 = vmatpush1.msra.mxu0 %v781
    %1139 = vmatprep.subr.mxu0 %v786
    %1140 = vmatpush1.msra.mxu0 %v785
    %1141 = vmatprep.subr.mxu0 %v790
    %1142 = vmatpush1.msra.mxu0 %v789
    %1143 = vmatprep.subr.mxu0 %v794
    %1144 = vmatpush1.msra.mxu0 %v793
    %1145 = vmatprep.subr.mxu0 %v798
    %1146 = vmatpush1.msra.mxu0 %v797
    %1147 = vmatprep.subr.mxu0 %v802
    %1148 = vmatpush1.msra.mxu0 %v801
    %1149 = vmatprep.subr.mxu0 %v806
    %1150 = vmatpush1.msra.mxu0 %v805
    %1151 = vmatprep.subr.mxu0 %v810
    %1152 = vmatpush1.msra.mxu0 %v809
    %1153 = vmatprep.subr.mxu0 %v814
    %1154 = vmatpush1.msra.mxu0 %v813
    %1155 = vmatprep.subr.mxu0 %v818
    %1156 = vmatpush1.msra.mxu0 %v817
    %1157 = vmatprep.subr.mxu0 %v822
    %1158 = vmatpush1.msra.mxu0 %v821
    %1159 = vmatprep.subr.mxu0 %v826
    %1160 = vmatpush1.msra.mxu0 %v825
    %1161 = vmatprep.subr.mxu0 %v830
    %1162 = vmatpush1.msra.mxu0 %v829
    %1163 = vmatprep.subr.mxu0 %v834
    %1164 = vmatpush1.msra.mxu0 %v833
    %1165 = vmatprep.subr.mxu0 %v838
    %1166 = vmatpush1.msra.mxu0 %v837
    %1167 = vmatprep.subr.mxu0 %v842
    %1168 = vmatpush1.msra.mxu0 %v841
    %1169 = vmatprep.subr.mxu0 %v846
    %1170 = vmatpush1.msra.mxu0 %v845
    %1171 = vmatprep.subr.mxu0 %v850
    %1172 = vmatpush1.msra.mxu0 %v849
    %1173 = vmatprep.subr.mxu0 %v854
    %1174 = vmatpush1.msra.mxu0 %v853
    %1175 = vmatprep.subr.mxu0 %v858
    %1176 = vmatpush1.msra.mxu0 %v857
    %1177 = vmatprep.subr.mxu0 %v862
    %1178 = vmatpush1.msra.mxu0 %v861
    %1179 = vmatprep.subr.mxu0 %v866
    %1180 = vmatpush1.msra.mxu0 %v865
    %1181 = vmatprep.subr.mxu0 %v870
    %1182 = vmatpush1.msra.mxu0 %v869
    %1183 = vmatprep.subr.mxu0 %v874
    %1184 = vmatpush1.msra.mxu0 %v873
    %1185 = vmatprep.subr.mxu0 %v878
    %1186 = vmatpush1.msra.mxu0 %v877
    %1187 = vmatprep.subr.mxu0 %v882
    %1188 = vmatpush1.msra.mxu0 %v881
    %1189 = vmatprep.subr.mxu0 %v886
    %1190 = vmatpush1.msra.mxu0 %v885
    %1191 = vmatprep.subr.mxu0 %v890
    %1192 = vmatpush1.msra.mxu0 %v889
    %1193 = vmatprep.subr.mxu0 %v894
    %1194 = vmatpush1.msra.mxu0 %v893
    %1195 = vmatprep.subr.mxu0 %v898
    %1196 = vmatpush1.msra.mxu0 %v897
    %1197 = vmatprep.mubr.f32.mxu0 %v615
    %1198 = vmatmul.mubr.f32.gmra.mrb[0].mxu0 %v614
    %v1199 = vpop.f32.mrb[0].mxu0
    %v1200 = vadd.f32 %v1129, %v1199
    %v1201 = vpop.f32.mrb[0].mxu0
    %v1202 = vadd.f32 %v1131, %v1201
    %1203 = vdwg.mxu0
    %1204 = vst [vmem:[#allocation4] sm:$0xff] %v1058
    %1205 = vst [vmem:[#allocation4 + $0x8] sm:$0xff] %v1060
    %1206 = vst [vmem:[#allocation4 + $0x10] sm:$0xff] %v1200
    %1207 = vst [vmem:[#allocation4 + $0x18] sm:$0xff] %v1202
    // Predicated region
    $region26: #{tpu_custom_call.1} parent=1 // pred_check
      _
    $region27: #{tpu_custom_call.1} parent=1 // pred_check_branch
      %1209 = sbr.rel (0) target = $region29
    $region28: #{tpu_custom_call.1} parent=1 // pred_region
      %s1211 = ssub.s32 512, 512
      %1212 = vsyncadd [#allocation5], %s1211
      %s1214 = sshll.u32 [#allocation4], 4
      %s1215 = int_to_ptr.vmem [resolvable:$true] %s1214
      %1217 = dma.vmem_to_hbm [thread:$0]  %s1215, 512, %s6, [#allocation5]
    $region29: #{tpu_custom_call.1} parent=1 // pred_fallthru
      _
    // Predicated region
    $region30: #{tpu_custom_call.1} parent=1 // pred_check
      _
    $region31: #{tpu_custom_call.1} parent=1 // pred_check_branch
      %1219 = sbr.rel (0) target = $region33
    $region32: #{tpu_custom_call.1} parent=1 // pred_region
      %s1221 = ssub.s32 16, 16
      %1222 = vsyncadd [#allocation6], %s1221
      %1225 = dma.smem_to_hbm [#allocation7], 16, %s7, [#allocation6]
    $region33: #{tpu_custom_call.1} parent=1 // pred_fallthru
      _
    // Predicated region
    $region34: #{tpu_custom_call.1} parent=1 // pred_check
      _
    $region35: #{tpu_custom_call.1} parent=1 // pred_check_branch
      %1227 = sbr.rel (0) target = $region37
    $region36: #{tpu_custom_call.1} parent=1 // pred_region
      %1228 = dma.done [#allocation5], 512
    $region37: #{tpu_custom_call.1} parent=1 // pred_fallthru
      _
    // Predicated region
    $region38: #{tpu_custom_call.1} parent=1 // pred_check
      _
    $region39: #{tpu_custom_call.1} parent=1 // pred_check_branch
      %1230 = sbr.rel (0) target = $region41
    $region40: #{tpu_custom_call.1} parent=1 // pred_region
      %1231 = dma.done [#allocation6], 16
    $region41: #{tpu_custom_call.1} parent=1 // pred_fallthru
      _
    %1232 = sfence
    %1233 = vsyncpa [#allocation5], 1
    %1234 = vsyncpa [#allocation6], 1
  %1235 = vsyncmov [#allocation3]
  %s1236 = vpop.sfrf %1235
  %p1237 = scmp.eq.s32.totalorder %s1236, 0
  %p1238 = pneg %p1237
  %1240 = shalt.err (%p1238)

</llo_original>
